<compile_context>
chip_gen: v5e
topology: v5e:2x2
jax: 0.10.0
libtpu: 0.0.40
codegen_flags: <defaults>
</compile_context>

<pallas_src>
import math
import functools

import jax
import jax.numpy as jnp
from jax.experimental import pallas as pl
from jax.experimental.pallas import tpu as pltpu


# ----------------------------------------------------------------------------
# Generation-aware VMEM configuration
# ----------------------------------------------------------------------------
def _round_up(a, m):
    return -(-a // m) * m


def _tpu_config():
    """Scoped-VMEM limit and attention block budget per TPU generation."""
    try:
        kind = jax.devices()[0].device_kind.lower()
    except Exception:
        kind = ""
    if "v7" in kind:                                   # 64 MiB VMEM per TC
        return {"vmem_limit": 48 * 2**20, "attn_budget": 20 * 2**20}
    if any(s in kind for s in ("v4", "v5", "v6")):     # 128 MiB VMEM parts
        return {"vmem_limit": 100 * 2**20, "attn_budget": 40 * 2**20}
    return {"vmem_limit": 32 * 2**20, "attn_budget": 16 * 2**20}


_ROW_TARGET = 256   # M-tile target; fine for v5e's 4x128^2 MXU as well.


def _pick_row_tile(n_rows, target=_ROW_TARGET):
    """Return (tile, padded_rows).  Prefers an exact multiple-of-8 divisor of
    n_rows that yields >=2 grid steps (megacore); otherwise pads the rows so
    the tile never blows up to the full (possibly huge) row count."""
    best = None
    for t in range(8, min(target, n_rows // 2) + 1, 8):
        if n_rows % t == 0:
            best = t
    if best is not None:
        return best, n_rows
    tile = min(target, max(8, _round_up(max(n_rows // 2, 1), 8)))
    return tile, _round_up(n_rows, tile)


def _pick_batch_tile(batch, n_q, n_kv, d, n_heads, budget_bytes):
    """Divisor of `batch` used as the attention block's leading dim, sized so
    the double-buffered per-step block footprint stays under budget_bytes and
    (when possible) the grid keeps >=2 steps for the v7x megacore."""
    def pad(a, m):
        return _round_up(a, m)
    per_b = 4 * (pad(n_q, 8) * pad(d, 128)                       # q block
                 + pad(n_kv, 8) * pad(2 * d, 128)                # fused k|v
                 + 2 * n_heads * pad(n_q, 8) * pad(n_kv, 128)    # logits, probs
                 + pad(n_q, 8) * pad(d, 128))                    # ctx block
    per_b *= 2                                                    # double-buffered
    cap = max(1, budget_bytes // max(per_b, 1))
    divs = [t for t in range(1, batch + 1) if batch % t == 0 and t <= cap]
    best = max(divs) if divs else 1
    if batch // best < 2:
        alt = [t for t in divs if batch // t >= 2]
        if alt:
            best = max(alt)
    return best


# ----------------------------------------------------------------------------
# Kernel 1: row-tiled linear  y = x @ W + b   (bf16 operands if W is bf16)
# ----------------------------------------------------------------------------
def _linear_kernel(x_ref, w_ref, b_ref, o_ref):
    x = x_ref[...]                       # (row_tile, d_in)  f32
    w = w_ref[...]                       # (d_in, d_out)     f32 or bf16
    if w.dtype == jnp.bfloat16:          # bf16 operands, f32 accumulation
        x = x.astype(jnp.bfloat16)
    o_ref[...] = jnp.dot(x, w, preferred_element_type=jnp.float32) + b_ref[...]


def _linear(x2, w, b, *, vmem_limit):
    n_rows, d_in = x2.shape
    d_out = w.shape[1]
    tile, padded = _pick_row_tile(n_rows)
    if padded != n_rows:
        x2 = jnp.pad(x2, ((0, padded - n_rows), (0, 0)))
    out = pl.pallas_call(
        _linear_kernel,
        out_shape=jax.ShapeDtypeStruct((padded, d_out), jnp.float32),
        grid_spec=pltpu.PrefetchScalarGridSpec(
            num_scalar_prefetch=0,
            grid=(padded // tile,),
            in_specs=[
                pl.BlockSpec((tile, d_in), lambda i: (i, 0)),
                # constant index_map -> single buffer (no pointless double-buffer)
                pl.BlockSpec((d_in, d_out), lambda i: (0, 0),
                             pipeline_mode=pl.Buffered(buffer_count=1)),
                pl.BlockSpec((1, d_out), lambda i: (0, 0),
                             pipeline_mode=pl.Buffered(buffer_count=1)),
            ],
            out_specs=pl.BlockSpec((tile, d_out), lambda i: (i, 0)),
        ),
        compiler_params=pltpu.CompilerParams(
            dimension_semantics=("parallel",),
            vmem_limit_bytes=vmem_limit),
    )(x2, w, b)
    return out[:n_rows] if padded != n_rows else out


# ----------------------------------------------------------------------------
# Kernel 2: batched attention, gridded over batch, heads looped in-kernel.
#   q: (bt, n_q, d) pre-scaled by 1/sqrt(d_head);  kv: (bt, n_kv, 2d).
#   Heads are contiguous d_head-wide column slices -> no transposes anywhere.
# ----------------------------------------------------------------------------
def _attention_kernel(q_ref, kv_ref, logits_ref, probs_ref, ctx_ref,
                      *, n_heads, dh, d):
    q = q_ref[...]                       # (bt, n_q, d)   f32, pre-scaled
    kv = kv_ref[...]                     # (bt, n_kv, 2d) f32
    ctx_parts = []
    for h in range(n_heads):
        lo = h * dh
        qh = q[:, :, lo:lo + dh]                     # (bt, n_q, dh)
        kh = kv[:, :, lo:lo + dh]                    # (bt, n_kv, dh)
        vh = kv[:, :, d + lo:d + lo + dh]            # (bt, n_kv, dh)

        logits = jnp.einsum("bqc,bkc->bqk", qh, kh,
                            preferred_element_type=jnp.float32)
        logits_ref[:, h] = logits

        # numerically stable softmax, exact divide (exported probs sum to 1)
        m = jnp.max(logits, axis=-1, keepdims=True)
        e = jnp.exp(logits - m)
        probs = e / jnp.sum(e, axis=-1, keepdims=True)
        probs_ref[:, h] = probs

        ctx_parts.append(jnp.einsum("bqk,bkc->bqc", probs, vh,
                                    preferred_element_type=jnp.float32))
    # one lane-dense (last dim = d) store of the merged-head context
    ctx_ref[...] = jnp.concatenate(ctx_parts, axis=-1)


def _attention(q3, kv3, *, n_heads, batch_tile, vmem_limit):
    B, n_q, d = q3.shape
    _, n_kv, d2 = kv3.shape
    dh = d // n_heads
    return pl.pallas_call(
        functools.partial(_attention_kernel, n_heads=n_heads, dh=dh, d=d),
        out_shape=(
            jax.ShapeDtypeStruct((B, n_heads, n_q, n_kv), jnp.float32),
            jax.ShapeDtypeStruct((B, n_heads, n_q, n_kv), jnp.float32),
            jax.ShapeDtypeStruct((B, n_q, d), jnp.float32),
        ),
        grid_spec=pltpu.PrefetchScalarGridSpec(
            num_scalar_prefetch=0,
            grid=(B // batch_tile,),
            in_specs=[
                pl.BlockSpec((batch_tile, n_q, d), lambda i: (i, 0, 0)),
                pl.BlockSpec((batch_tile, n_kv, d2), lambda i: (i, 0, 0)),
            ],
            out_specs=[
                pl.BlockSpec((batch_tile, n_heads, n_q, n_kv),
                             lambda i: (i, 0, 0, 0)),
                pl.BlockSpec((batch_tile, n_heads, n_q, n_kv),
                             lambda i: (i, 0, 0, 0)),
                pl.BlockSpec((batch_tile, n_q, d), lambda i: (i, 0, 0)),
            ],
        ),
        compiler_params=pltpu.CompilerParams(
            dimension_semantics=("parallel",),
            vmem_limit_bytes=vmem_limit),
    )(q3, kv3)


# ----------------------------------------------------------------------------
# Parameter preparation (run ONCE, outside the jitted forward)
# ----------------------------------------------------------------------------
def prepare_params(params, *, n_heads, use_bf16=False):
    """Fuse K|V weights, fold 1/sqrt(d_head) into W_q/b_q, optionally cast the
    weight matrices to bf16 (biases stay f32; accumulation is always f32)."""
    d = params["wq"].shape[0]
    dh = d // n_heads
    scale = 1.0 / math.sqrt(dh)
    wdt = jnp.bfloat16 if use_bf16 else jnp.float32
    prepared = {
        "wq": (params["wq"] * scale).astype(wdt),
        "bq": params["bq"] * scale,
        "wkv": jnp.concatenate([params["wk"], params["wv"]], axis=1).astype(wdt),
        "bkv": jnp.concatenate([params["bk"], params["bv"]], axis=1),
    }
    if n_heads > 1:
        prepared["wo"] = params["wo"].astype(wdt)
        prepared["bo"] = params["bo"]
    return prepared


# ----------------------------------------------------------------------------
# Full forward pass (matches MultiheadAttention.forward with compression=None)
# ----------------------------------------------------------------------------
@functools.partial(jax.jit, static_argnames=("n_heads",))
def multihead_attention(x_q, x_kv, prepared, *, n_heads):
    """x_q: (B, n_q, d), x_kv: (B, n_kv, d); `prepared` from prepare_params().
    Returns (x, {'attention_logits', 'attention_probs'}) like the module."""
    B, n_q, d = x_q.shape
    _, n_kv, _ = x_kv.shape
    assert d % n_heads == 0
    cfg = _tpu_config()

    # Projections over the flattened (batch*tokens) axis -> full MXU tiles.
    q2 = _linear(x_q.reshape(B * n_q, d), prepared["wq"], prepared["bq"],
                 vmem_limit=cfg["vmem_limit"])
    kv2 = _linear(x_kv.reshape(B * n_kv, d), prepared["wkv"], prepared["bkv"],
                  vmem_limit=cfg["vmem_limit"])

    # No head split / K-V slicing in the wrapper: contiguous reshapes only.
    q3 = q2.reshape(B, n_q, d)
    kv3 = kv2.reshape(B, n_kv, 2 * d)

    batch_tile = _pick_batch_tile(B, n_q, n_kv, d, n_heads, cfg["attn_budget"])
    logits4, probs4, ctx = _attention(q3, kv3, n_heads=n_heads,
                                      batch_tile=batch_tile,
                                      vmem_limit=cfg["vmem_limit"])

    # Output projection (module skips it when n_heads == 1).
    x2 = ctx.reshape(B * n_q, d)
    if n_heads > 1:
        x2 = _linear(x2, prepared["wo"], prepared["bo"],
                     vmem_limit=cfg["vmem_limit"])
    x = x2.reshape(B, n_q, d)

    # (B, H, n_q, n_kv) -> (B*H, n_q, n_kv): contiguous reshape, free.
    return x, {
        "attention_logits": logits4.reshape(B * n_heads, n_q, n_kv),
        "attention_probs": probs4.reshape(B * n_heads, n_q, n_kv),
    }


# ----------------------------------------------------------------------------
# Pure-JAX reference (mirrors the PyTorch forward) + test harness
# ----------------------------------------------------------------------------
def _reference(x_q, x_kv, params, n_heads):
    d = x_q.shape[-1]
    dh = d // n_heads

    def lin(x, w, b):
        return x @ w + b

    q = lin(x_q, params["wq"], params["bq"])
    k = lin(x_kv, params["wk"], params["bk"])
    v = lin(x_kv, params["wv"], params["bv"])

    def reshape(t):
        B, T, D = t.shape
        return (t.reshape(B, T, n_heads, dh).transpose(0, 2, 1, 3)
                 .reshape(B * n_heads, T, dh))

    q, k, v = reshape(q), reshape(k), reshape(v)
    logits = jnp.einsum("btd,bsd->bts", q, k) / math.sqrt(dh)
    probs = jax.nn.softmax(logits, axis=-1)
    x = jnp.einsum("bts,bsd->btd", probs, v)
    B, n_q = x_q.shape[0], x_q.shape[1]
    x = (x.reshape(B, n_heads, n_q, dh).transpose(0, 2, 1, 3)
          .reshape(B, n_q, d))
    if n_heads > 1:                      # module applies W_out only if n_heads>1
        x = lin(x, params["wo"], params["bo"])
    return x, logits, probs


def init_params(key, d_token, n_heads):
    """xavier_uniform(gain=1/sqrt(2)) for W_q/W_k/W_v, default Linear init for
    W_out, zero biases; weights stored transposed to (d_in, d_out)."""
    ks = jax.random.split(key, 4)
    xav = (1.0 / math.sqrt(2.0)) * math.sqrt(6.0 / (d_token + d_token))
    kai = 1.0 / math.sqrt(d_token)

    def w(k, lim):
        return jax.random.uniform(k, (d_token, d_token), jnp.float32, -lim, lim)

    zeros_b = jnp.zeros((1, d_token), jnp.float32)
    return {
        "wq": w(ks[0], xav), "bq": zeros_b,
        "wk": w(ks[1], xav), "bk": zeros_b,
        "wv": w(ks[2], xav), "bv": zeros_b,
        "wo": w(ks[3], kai), "bo": zeros_b,
    }


if __name__ == "__main__":
    B, T, D, H = 2, 8, 32, 4   # batch, tokens, d_token, n_heads

    key = jax.random.PRNGKey(0)
    k_xq, k_xkv, k_p = jax.random.split(key, 3)
    x_q = jax.random.normal(k_xq, (B, T, D), jnp.float32)
    x_kv = jax.random.normal(k_xkv, (B, T, D), jnp.float32)
    params = init_params(k_p, D, H)

    ref_out, ref_logits, ref_probs = _reference(x_q, x_kv, params, H)

    # f32 MXU operands.
    prep32 = prepare_params(params, n_heads=H, use_bf16=False)
    out, aux = multihead_attention(x_q, x_kv, prep32, n_heads=H)
    out = jax.block_until_ready(out)
    logits = jax.block_until_ready(aux["attention_logits"])
    probs = jax.block_until_ready(aux["attention_probs"])
    assert jnp.allclose(logits, ref_logits, atol=1e-3, rtol=1e-3)
    assert jnp.allclose(probs, ref_probs, atol=1e-3, rtol=1e-3)
    assert jnp.allclose(out, ref_out, atol=1e-3, rtol=1e-3)

    # bf16 projection operands / f32 accumulation, f32 attention math.
    prep16 = prepare_params(params, n_heads=H, use_bf16=True)
    out_bf, aux_bf = multihead_attention(x_q, x_kv, prep16, n_heads=H)
    out_bf = jax.block_until_ready(out_bf)
    assert jnp.allclose(aux_bf["attention_logits"], ref_logits, atol=1e-1, rtol=1e-1)
    assert jnp.allclose(aux_bf["attention_probs"], ref_probs, atol=1e-1, rtol=1e-1)
    assert jnp.allclose(out_bf, ref_out, atol=1e-1, rtol=1e-1)

    print("KERNEL_OK")
</pallas_src>

<mosaic_0001>
module attributes {stable_mosaic.version = 11 : i64} {
  func.func @_linear_kernel(%arg0: i32, %arg1: memref<8x32xf32, #tpu.memory_space<vmem>>, %arg2: memref<32x32xf32, #tpu.memory_space<vmem>>, %arg3: memref<1x32xf32, #tpu.memory_space<vmem>>, %arg4: memref<8x32xf32, #tpu.memory_space<vmem>>) attributes {dimension_semantics = [#tpu.dimension_semantics<parallel>], iteration_bounds = array<i64: 2>, scalar_prefetch = 0 : i64, scratch_operands = 0 : i64, tpu.core_type = #tpu.core_type<tc>, window_params = [{transform_indices = @transform_0, window_bounds = array<i64: 8, 32>}, {pipeline_mode = #tpu.pipeline_mode<synchronous>, transform_indices = @transform_1, window_bounds = array<i64: 32, 32>}, {pipeline_mode = #tpu.pipeline_mode<synchronous>, transform_indices = @transform_2, window_bounds = array<i64: 1, 32>}, {transform_indices = @transform_3, window_bounds = array<i64: 8, 32>}]} {
    %c0 = arith.constant 0 : index
    %c0_0 = arith.constant 0 : index
    %0 = vector.load %arg1[%c0, %c0_0] : memref<8x32xf32, #tpu.memory_space<vmem>>, vector<8x32xf32>
    %c0_1 = arith.constant 0 : index
    %c0_2 = arith.constant 0 : index
    %1 = vector.load %arg2[%c0_1, %c0_2] : memref<32x32xf32, #tpu.memory_space<vmem>>, vector<32x32xf32>
    %cst = arith.constant dense<0.000000e+00> : vector<8x32xf32>
    %2 = tpu.matmul %0, %1, %cst {dimension_numbers = #tpu.dot_dimension_numbers<[1], [0], [0], [1], [0, 0, 1, 1], [], []>} : vector<8x32xf32>, vector<32x32xf32>, vector<8x32xf32> -> vector<8x32xf32>
    %c0_3 = arith.constant 0 : index
    %c0_4 = arith.constant 0 : index
    %3 = vector.load %arg3[%c0_3, %c0_4] : memref<1x32xf32, #tpu.memory_space<vmem>>, vector<1x32xf32>
    %4 = vector.broadcast %3 : vector<1x32xf32> to vector<8x32xf32>
    %5 = arith.addf %2, %4 : vector<8x32xf32>
    %c0_5 = arith.constant 0 : index
    %c0_6 = arith.constant 0 : index
    %6 = vector.load %arg4[%c0_5, %c0_6] : memref<8x32xf32, #tpu.memory_space<vmem>>, vector<8x32xf32>
    tpu.vector_store %arg4[%c0_5, %c0_6], %5 {strides = array<i32>} : memref<8x32xf32, #tpu.memory_space<vmem>>, vector<8x32xf32>,
    return
  }
  func.func @transform_0(%arg0: i32) -> (i32, i32) {
    %c0_i32 = arith.constant 0 : i32
    %c0_i32_0 = arith.constant 0 : i32
    return %arg0, %c0_i32 : i32, i32
  }
  func.func @transform_1(%arg0: i32) -> (i32, i32) {
    %c0_i32 = arith.constant 0 : i32
    %c0_i32_0 = arith.constant 0 : i32
    %c0_i32_1 = arith.constant 0 : i32
    return %c0_i32, %c0_i32_0 : i32, i32
  }
  func.func @transform_2(%arg0: i32) -> (i32, i32) {
    %c0_i32 = arith.constant 0 : i32
    %c0_i32_0 = arith.constant 0 : i32
    %c0_i32_1 = arith.constant 0 : i32
    return %c0_i32, %c0_i32_0 : i32, i32
  }
  func.func @transform_3(%arg0: i32) -> (i32, i32) {
    %c0_i32 = arith.constant 0 : i32
    %c0_i32_0 = arith.constant 0 : i32
    return %arg0, %c0_i32 : i32, i32
  }
}

module attributes {stable_mosaic.version = 11 : i64} {
  func.func @_attention_kernel(%arg0: i32, %arg1: memref<1x8x32xf32, #tpu.memory_space<vmem>>, %arg2: memref<1x8x64xf32, #tpu.memory_space<vmem>>, %arg3: memref<1x4x8x8xf32, #tpu.memory_space<vmem>>, %arg4: memref<1x4x8x8xf32, #tpu.memory_space<vmem>>, %arg5: memref<1x8x32xf32, #tpu.memory_space<vmem>>) attributes {dimension_semantics = [#tpu.dimension_semantics<parallel>], iteration_bounds = array<i64: 2>, scalar_prefetch = 0 : i64, scratch_operands = 0 : i64, tpu.core_type = #tpu.core_type<tc>, window_params = [{transform_indices = @transform_0, window_bounds = array<i64: 1, 8, 32>}, {transform_indices = @transform_1, window_bounds = array<i64: 1, 8, 64>}, {transform_indices = @transform_2, window_bounds = array<i64: 1, 4, 8, 8>}, {transform_indices = @transform_3, window_bounds = array<i64: 1, 4, 8, 8>}, {transform_indices = @transform_4, window_bounds = array<i64: 1, 8, 32>}]} {
    %c0 = arith.constant 0 : index
    %c0_0 = arith.constant 0 : index
    %c0_1 = arith.constant 0 : index
    %0 = vector.load %arg1[%c0, %c0_0, %c0_1] : memref<1x8x32xf32, #tpu.memory_space<vmem>>, vector<1x8x32xf32>
    %c0_2 = arith.constant 0 : index
    %c0_3 = arith.constant 0 : index
    %c0_4 = arith.constant 0 : index
    %1 = vector.load %arg2[%c0_2, %c0_3, %c0_4] : memref<1x8x64xf32, #tpu.memory_space<vmem>>, vector<1x8x64xf32>
    %2 = vector.extract_strided_slice %0 {offsets = [0, 0, 0], sizes = [1, 8, 8], strides = [1, 1, 1]} : vector<1x8x32xf32> to vector<1x8x8xf32>
    %3 = vector.extract_strided_slice %1 {offsets = [0, 0, 0], sizes = [1, 8, 8], strides = [1, 1, 1]} : vector<1x8x64xf32> to vector<1x8x8xf32>
    %4 = vector.extract_strided_slice %1 {offsets = [0, 0, 32], sizes = [1, 8, 8], strides = [1, 1, 1]} : vector<1x8x64xf32> to vector<1x8x8xf32>
    "tpu.trace_start"() <{level = 10 : i32, message = "bqc,bkc->bqk"}> : () -> ()
    %cst = arith.constant dense<0.000000e+00> : vector<1x8x8xf32>
    %5 = tpu.matmul %2, %3, %cst {dimension_numbers = #tpu.dot_dimension_numbers<[2], [2], [1], [1], [0, 0, 0, 1, 1, 1], [0], [0]>} : vector<1x8x8xf32>, vector<1x8x8xf32>, vector<1x8x8xf32> -> vector<1x8x8xf32>
    "tpu.trace_stop"() : () -> ()
    %c0_5 = arith.constant 0 : index
    %c0_6 = arith.constant 0 : index
    %c0_7 = arith.constant 0 : index
    %c0_8 = arith.constant 0 : index
    %6 = vector.load %arg3[%c0_5, %c0_6, %c0_7, %c0_8] : memref<1x4x8x8xf32, #tpu.memory_space<vmem>>, vector<1x1x8x8xf32>
    %7 = vector.shape_cast %6 : vector<1x1x8x8xf32> to vector<1x8x8xf32>
    %8 = vector.shape_cast %5 : vector<1x8x8xf32> to vector<1x1x8x8xf32>
    tpu.vector_store %arg3[%c0_5, %c0_6, %c0_7, %c0_8], %8 {strides = array<i32>} : memref<1x4x8x8xf32, #tpu.memory_space<vmem>>, vector<1x1x8x8xf32>,
    %cst_9 = arith.constant dense<0xFF800000> : vector<1x8xf32>
    %9 = vector.multi_reduction <maximumf>, %5, %cst_9 [2] : vector<1x8x8xf32> to vector<1x8xf32>
    %10 = vector.shape_cast %9 : vector<1x8xf32> to vector<1x8x1xf32>
    %11 = vector.broadcast %10 : vector<1x8x1xf32> to vector<1x8x8xf32>
    %12 = arith.subf %5, %11 : vector<1x8x8xf32>
    %13 = math.exp %12 : vector<1x8x8xf32>
    %cst_10 = arith.constant dense<0.000000e+00> : vector<1x8xf32>
    %14 = vector.multi_reduction <add>, %13, %cst_10 [2] : vector<1x8x8xf32> to vector<1x8xf32>
    %15 = vector.shape_cast %14 : vector<1x8xf32> to vector<1x8x1xf32>
    %16 = vector.broadcast %15 : vector<1x8x1xf32> to vector<1x8x8xf32>
    %17 = arith.divf %13, %16 : vector<1x8x8xf32>
    %c0_11 = arith.constant 0 : index
    %c0_12 = arith.constant 0 : index
    %c0_13 = arith.constant 0 : index
    %c0_14 = arith.constant 0 : index
    %18 = vector.load %arg4[%c0_11, %c0_12, %c0_13, %c0_14] : memref<1x4x8x8xf32, #tpu.memory_space<vmem>>, vector<1x1x8x8xf32>
    %19 = vector.shape_cast %18 : vector<1x1x8x8xf32> to vector<1x8x8xf32>
    %20 = vector.shape_cast %17 : vector<1x8x8xf32> to vector<1x1x8x8xf32>
    tpu.vector_store %arg4[%c0_11, %c0_12, %c0_13, %c0_14], %20 {strides = array<i32>} : memref<1x4x8x8xf32, #tpu.memory_space<vmem>>, vector<1x1x8x8xf32>,
    "tpu.trace_start"() <{level = 10 : i32, message = "bqk,bkc->bqc"}> : () -> ()
    %cst_15 = arith.constant dense<0.000000e+00> : vector<1x8x8xf32>
    %21 = tpu.matmul %17, %4, %cst_15 {dimension_numbers = #tpu.dot_dimension_numbers<[2], [1], [1], [2], [0, 0, 0, 1, 1, 2], [0], [0]>} : vector<1x8x8xf32>, vector<1x8x8xf32>, vector<1x8x8xf32> -> vector<1x8x8xf32>
    "tpu.trace_stop"() : () -> ()
    %22 = vector.extract_strided_slice %0 {offsets = [0, 0, 8], sizes = [1, 8, 8], strides = [1, 1, 1]} : vector<1x8x32xf32> to vector<1x8x8xf32>
    %23 = vector.extract_strided_slice %1 {offsets = [0, 0, 8], sizes = [1, 8, 8], strides = [1, 1, 1]} : vector<1x8x64xf32> to vector<1x8x8xf32>
    %24 = vector.extract_strided_slice %1 {offsets = [0, 0, 40], sizes = [1, 8, 8], strides = [1, 1, 1]} : vector<1x8x64xf32> to vector<1x8x8xf32>
    "tpu.trace_start"() <{level = 10 : i32, message = "bqc,bkc->bqk"}> : () -> ()
    %cst_16 = arith.constant dense<0.000000e+00> : vector<1x8x8xf32>
    %25 = tpu.matmul %22, %23, %cst_16 {dimension_numbers = #tpu.dot_dimension_numbers<[2], [2], [1], [1], [0, 0, 0, 1, 1, 1], [0], [0]>} : vector<1x8x8xf32>, vector<1x8x8xf32>, vector<1x8x8xf32> -> vector<1x8x8xf32>
    "tpu.trace_stop"() : () -> ()
    %c0_17 = arith.constant 0 : index
    %c1 = arith.constant 1 : index
    %c0_18 = arith.constant 0 : index
    %c0_19 = arith.constant 0 : index
    %26 = vector.load %arg3[%c0_17, %c1, %c0_18, %c0_19] : memref<1x4x8x8xf32, #tpu.memory_space<vmem>>, vector<1x1x8x8xf32>
    %27 = vector.shape_cast %26 : vector<1x1x8x8xf32> to vector<1x8x8xf32>
    %28 = vector.shape_cast %25 : vector<1x8x8xf32> to vector<1x1x8x8xf32>
    tpu.vector_store %arg3[%c0_17, %c1, %c0_18, %c0_19], %28 {strides = array<i32>} : memref<1x4x8x8xf32, #tpu.memory_space<vmem>>, vector<1x1x8x8xf32>,
    %cst_20 = arith.constant dense<0xFF800000> : vector<1x8xf32>
    %29 = vector.multi_reduction <maximumf>, %25, %cst_20 [2] : vector<1x8x8xf32> to vector<1x8xf32>
    %30 = vector.shape_cast %29 : vector<1x8xf32> to vector<1x8x1xf32>
    %31 = vector.broadcast %30 : vector<1x8x1xf32> to vector<1x8x8xf32>
    %32 = arith.subf %25, %31 : vector<1x8x8xf32>
    %33 = math.exp %32 : vector<1x8x8xf32>
    %cst_21 = arith.constant dense<0.000000e+00> : vector<1x8xf32>
    %34 = vector.multi_reduction <add>, %33, %cst_21 [2] : vector<1x8x8xf32> to vector<1x8xf32>
    %35 = vector.shape_cast %34 : vector<1x8xf32> to vector<1x8x1xf32>
    %36 = vector.broadcast %35 : vector<1x8x1xf32> to vector<1x8x8xf32>
    %37 = arith.divf %33, %36 : vector<1x8x8xf32>
    %c0_22 = arith.constant 0 : index
    %c1_23 = arith.constant 1 : index
    %c0_24 = arith.constant 0 : index
    %c0_25 = arith.constant 0 : index
    %38 = vector.load %arg4[%c0_22, %c1_23, %c0_24, %c0_25] : memref<1x4x8x8xf32, #tpu.memory_space<vmem>>, vector<1x1x8x8xf32>
    %39 = vector.shape_cast %38 : vector<1x1x8x8xf32> to vector<1x8x8xf32>
    %40 = vector.shape_cast %37 : vector<1x8x8xf32> to vector<1x1x8x8xf32>
    tpu.vector_store %arg4[%c0_22, %c1_23, %c0_24, %c0_25], %40 {strides = array<i32>} : memref<1x4x8x8xf32, #tpu.memory_space<vmem>>, vector<1x1x8x8xf32>,
    "tpu.trace_start"() <{level = 10 : i32, message = "bqk,bkc->bqc"}> : () -> ()
    %cst_26 = arith.constant dense<0.000000e+00> : vector<1x8x8xf32>
    %41 = tpu.matmul %37, %24, %cst_26 {dimension_numbers = #tpu.dot_dimension_numbers<[2], [1], [1], [2], [0, 0, 0, 1, 1, 2], [0], [0]>} : vector<1x8x8xf32>, vector<1x8x8xf32>, vector<1x8x8xf32> -> vector<1x8x8xf32>
    "tpu.trace_stop"() : () -> ()
    %42 = vector.extract_strided_slice %0 {offsets = [0, 0, 16], sizes = [1, 8, 8], strides = [1, 1, 1]} : vector<1x8x32xf32> to vector<1x8x8xf32>
    %43 = vector.extract_strided_slice %1 {offsets = [0, 0, 16], sizes = [1, 8, 8], strides = [1, 1, 1]} : vector<1x8x64xf32> to vector<1x8x8xf32>
    %44 = vector.extract_strided_slice %1 {offsets = [0, 0, 48], sizes = [1, 8, 8], strides = [1, 1, 1]} : vector<1x8x64xf32> to vector<1x8x8xf32>
    "tpu.trace_start"() <{level = 10 : i32, message = "bqc,bkc->bqk"}> : () -> ()
    %cst_27 = arith.constant dense<0.000000e+00> : vector<1x8x8xf32>
    %45 = tpu.matmul %42, %43, %cst_27 {dimension_numbers = #tpu.dot_dimension_numbers<[2], [2], [1], [1], [0, 0, 0, 1, 1, 1], [0], [0]>} : vector<1x8x8xf32>, vector<1x8x8xf32>, vector<1x8x8xf32> -> vector<1x8x8xf32>
    "tpu.trace_stop"() : () -> ()
    %c0_28 = arith.constant 0 : index
    %c2 = arith.constant 2 : index
    %c0_29 = arith.constant 0 : index
    %c0_30 = arith.constant 0 : index
    %46 = vector.load %arg3[%c0_28, %c2, %c0_29, %c0_30] : memref<1x4x8x8xf32, #tpu.memory_space<vmem>>, vector<1x1x8x8xf32>
    %47 = vector.shape_cast %46 : vector<1x1x8x8xf32> to vector<1x8x8xf32>
    %48 = vector.shape_cast %45 : vector<1x8x8xf32> to vector<1x1x8x8xf32>
    tpu.vector_store %arg3[%c0_28, %c2, %c0_29, %c0_30], %48 {strides = array<i32>} : memref<1x4x8x8xf32, #tpu.memory_space<vmem>>, vector<1x1x8x8xf32>,
    %cst_31 = arith.constant dense<0xFF800000> : vector<1x8xf32>
    %49 = vector.multi_reduction <maximumf>, %45, %cst_31 [2] : vector<1x8x8xf32> to vector<1x8xf32>
    %50 = vector.shape_cast %49 : vector<1x8xf32> to vector<1x8x1xf32>
    %51 = vector.broadcast %50 : vector<1x8x1xf32> to vector<1x8x8xf32>
    %52 = arith.subf %45, %51 : vector<1x8x8xf32>
    %53 = math.exp %52 : vector<1x8x8xf32>
    %cst_32 = arith.constant dense<0.000000e+00> : vector<1x8xf32>
    %54 = vector.multi_reduction <add>, %53, %cst_32 [2] : vector<1x8x8xf32> to vector<1x8xf32>
    %55 = vector.shape_cast %54 : vector<1x8xf32> to vector<1x8x1xf32>
    %56 = vector.broadcast %55 : vector<1x8x1xf32> to vector<1x8x8xf32>
    %57 = arith.divf %53, %56 : vector<1x8x8xf32>
    %c0_33 = arith.constant 0 : index
    %c2_34 = arith.constant 2 : index
    %c0_35 = arith.constant 0 : index
    %c0_36 = arith.constant 0 : index
    %58 = vector.load %arg4[%c0_33, %c2_34, %c0_35, %c0_36] : memref<1x4x8x8xf32, #tpu.memory_space<vmem>>, vector<1x1x8x8xf32>
    %59 = vector.shape_cast %58 : vector<1x1x8x8xf32> to vector<1x8x8xf32>
    %60 = vector.shape_cast %57 : vector<1x8x8xf32> to vector<1x1x8x8xf32>
    tpu.vector_store %arg4[%c0_33, %c2_34, %c0_35, %c0_36], %60 {strides = array<i32>} : memref<1x4x8x8xf32, #tpu.memory_space<vmem>>, vector<1x1x8x8xf32>,
    "tpu.trace_start"() <{level = 10 : i32, message = "bqk,bkc->bqc"}> : () -> ()
    %cst_37 = arith.constant dense<0.000000e+00> : vector<1x8x8xf32>
    %61 = tpu.matmul %57, %44, %cst_37 {dimension_numbers = #tpu.dot_dimension_numbers<[2], [1], [1], [2], [0, 0, 0, 1, 1, 2], [0], [0]>} : vector<1x8x8xf32>, vector<1x8x8xf32>, vector<1x8x8xf32> -> vector<1x8x8xf32>
    "tpu.trace_stop"() : () -> ()
    %62 = vector.extract_strided_slice %0 {offsets = [0, 0, 24], sizes = [1, 8, 8], strides = [1, 1, 1]} : vector<1x8x32xf32> to vector<1x8x8xf32>
    %63 = vector.extract_strided_slice %1 {offsets = [0, 0, 24], sizes = [1, 8, 8], strides = [1, 1, 1]} : vector<1x8x64xf32> to vector<1x8x8xf32>
    %64 = vector.extract_strided_slice %1 {offsets = [0, 0, 56], sizes = [1, 8, 8], strides = [1, 1, 1]} : vector<1x8x64xf32> to vector<1x8x8xf32>
    "tpu.trace_start"() <{level = 10 : i32, message = "bqc,bkc->bqk"}> : () -> ()
    %cst_38 = arith.constant dense<0.000000e+00> : vector<1x8x8xf32>
    %65 = tpu.matmul %62, %63, %cst_38 {dimension_numbers = #tpu.dot_dimension_numbers<[2], [2], [1], [1], [0, 0, 0, 1, 1, 1], [0], [0]>} : vector<1x8x8xf32>, vector<1x8x8xf32>, vector<1x8x8xf32> -> vector<1x8x8xf32>
    "tpu.trace_stop"() : () -> ()
    %c0_39 = arith.constant 0 : index
    %c3 = arith.constant 3 : index
    %c0_40 = arith.constant 0 : index
    %c0_41 = arith.constant 0 : index
    %66 = vector.load %arg3[%c0_39, %c3, %c0_40, %c0_41] : memref<1x4x8x8xf32, #tpu.memory_space<vmem>>, vector<1x1x8x8xf32>
    %67 = vector.shape_cast %66 : vector<1x1x8x8xf32> to vector<1x8x8xf32>
    %68 = vector.shape_cast %65 : vector<1x8x8xf32> to vector<1x1x8x8xf32>
    tpu.vector_store %arg3[%c0_39, %c3, %c0_40, %c0_41], %68 {strides = array<i32>} : memref<1x4x8x8xf32, #tpu.memory_space<vmem>>, vector<1x1x8x8xf32>,
    %cst_42 = arith.constant dense<0xFF800000> : vector<1x8xf32>
    %69 = vector.multi_reduction <maximumf>, %65, %cst_42 [2] : vector<1x8x8xf32> to vector<1x8xf32>
    %70 = vector.shape_cast %69 : vector<1x8xf32> to vector<1x8x1xf32>
    %71 = vector.broadcast %70 : vector<1x8x1xf32> to vector<1x8x8xf32>
    %72 = arith.subf %65, %71 : vector<1x8x8xf32>
    %73 = math.exp %72 : vector<1x8x8xf32>
    %cst_43 = arith.constant dense<0.000000e+00> : vector<1x8xf32>
    %74 = vector.multi_reduction <add>, %73, %cst_43 [2] : vector<1x8x8xf32> to vector<1x8xf32>
    %75 = vector.shape_cast %74 : vector<1x8xf32> to vector<1x8x1xf32>
    %76 = vector.broadcast %75 : vector<1x8x1xf32> to vector<1x8x8xf32>
    %77 = arith.divf %73, %76 : vector<1x8x8xf32>
    %c0_44 = arith.constant 0 : index
    %c3_45 = arith.constant 3 : index
    %c0_46 = arith.constant 0 : index
    %c0_47 = arith.constant 0 : index
    %78 = vector.load %arg4[%c0_44, %c3_45, %c0_46, %c0_47] : memref<1x4x8x8xf32, #tpu.memory_space<vmem>>, vector<1x1x8x8xf32>
    %79 = vector.shape_cast %78 : vector<1x1x8x8xf32> to vector<1x8x8xf32>
    %80 = vector.shape_cast %77 : vector<1x8x8xf32> to vector<1x1x8x8xf32>
    tpu.vector_store %arg4[%c0_44, %c3_45, %c0_46, %c0_47], %80 {strides = array<i32>} : memref<1x4x8x8xf32, #tpu.memory_space<vmem>>, vector<1x1x8x8xf32>,
    "tpu.trace_start"() <{level = 10 : i32, message = "bqk,bkc->bqc"}> : () -> ()
    %cst_48 = arith.constant dense<0.000000e+00> : vector<1x8x8xf32>
    %81 = tpu.matmul %77, %64, %cst_48 {dimension_numbers = #tpu.dot_dimension_numbers<[2], [1], [1], [2], [0, 0, 0, 1, 1, 2], [0], [0]>} : vector<1x8x8xf32>, vector<1x8x8xf32>, vector<1x8x8xf32> -> vector<1x8x8xf32>
    "tpu.trace_stop"() : () -> ()
    %82 = tpu.concatenate %21, %41, %61, %81 in 2 : vector<1x8x8xf32>, vector<1x8x8xf32>, vector<1x8x8xf32>, vector<1x8x8xf32> -> vector<1x8x32xf32>
    %c0_49 = arith.constant 0 : index
    %c0_50 = arith.constant 0 : index
    %c0_51 = arith.constant 0 : index
    %83 = vector.load %arg5[%c0_49, %c0_50, %c0_51] : memref<1x8x32xf32, #tpu.memory_space<vmem>>, vector<1x8x32xf32>
    tpu.vector_store %arg5[%c0_49, %c0_50, %c0_51], %82 {strides = array<i32>} : memref<1x8x32xf32, #tpu.memory_space<vmem>>, vector<1x8x32xf32>,
    return
  }
  func.func @transform_0(%arg0: i32) -> (i32, i32, i32) {
    %c0_i32 = arith.constant 0 : i32
    %c0_i32_0 = arith.constant 0 : i32
    %c0_i32_1 = arith.constant 0 : i32
    return %arg0, %c0_i32, %c0_i32_0 : i32, i32, i32
  }
  func.func @transform_1(%arg0: i32) -> (i32, i32, i32) {
    %c0_i32 = arith.constant 0 : i32
    %c0_i32_0 = arith.constant 0 : i32
    %c0_i32_1 = arith.constant 0 : i32
    return %arg0, %c0_i32, %c0_i32_0 : i32, i32, i32
  }
  func.func @transform_2(%arg0: i32) -> (i32, i32, i32, i32) {
    %c0_i32 = arith.constant 0 : i32
    %c0_i32_0 = arith.constant 0 : i32
    %c0_i32_1 = arith.constant 0 : i32
    %c0_i32_2 = arith.constant 0 : i32
    return %arg0, %c0_i32, %c0_i32_0, %c0_i32_1 : i32, i32, i32, i32
  }
  func.func @transform_3(%arg0: i32) -> (i32, i32, i32, i32) {
    %c0_i32 = arith.constant 0 : i32
    %c0_i32_0 = arith.constant 0 : i32
    %c0_i32_1 = arith.constant 0 : i32
    %c0_i32_2 = arith.constant 0 : i32
    return %arg0, %c0_i32, %c0_i32_0, %c0_i32_1 : i32, i32, i32, i32
  }
  func.func @transform_4(%arg0: i32) -> (i32, i32, i32) {
    %c0_i32 = arith.constant 0 : i32
    %c0_i32_0 = arith.constant 0 : i32
    %c0_i32_1 = arith.constant 0 : i32
    return %arg0, %c0_i32, %c0_i32_0 : i32, i32, i32
  }
}

module attributes {stable_mosaic.version = 11 : i64} {
  func.func @_linear_kernel(%arg0: i32, %arg1: memref<8x32xf32, #tpu.memory_space<vmem>>, %arg2: memref<32x64xf32, #tpu.memory_space<vmem>>, %arg3: memref<1x64xf32, #tpu.memory_space<vmem>>, %arg4: memref<8x64xf32, #tpu.memory_space<vmem>>) attributes {dimension_semantics = [#tpu.dimension_semantics<parallel>], iteration_bounds = array<i64: 2>, scalar_prefetch = 0 : i64, scratch_operands = 0 : i64, tpu.core_type = #tpu.core_type<tc>, window_params = [{transform_indices = @transform_0, window_bounds = array<i64: 8, 32>}, {pipeline_mode = #tpu.pipeline_mode<synchronous>, transform_indices = @transform_1, window_bounds = array<i64: 32, 64>}, {pipeline_mode = #tpu.pipeline_mode<synchronous>, transform_indices = @transform_2, window_bounds = array<i64: 1, 64>}, {transform_indices = @transform_3, window_bounds = array<i64: 8, 64>}]} {
    %c0 = arith.constant 0 : index
    %c0_0 = arith.constant 0 : index
    %0 = vector.load %arg1[%c0, %c0_0] : memref<8x32xf32, #tpu.memory_space<vmem>>, vector<8x32xf32>
    %c0_1 = arith.constant 0 : index
    %c0_2 = arith.constant 0 : index
    %1 = vector.load %arg2[%c0_1, %c0_2] : memref<32x64xf32, #tpu.memory_space<vmem>>, vector<32x64xf32>
    %cst = arith.constant dense<0.000000e+00> : vector<8x64xf32>
    %2 = tpu.matmul %0, %1, %cst {dimension_numbers = #tpu.dot_dimension_numbers<[1], [0], [0], [1], [0, 0, 1, 1], [], []>} : vector<8x32xf32>, vector<32x64xf32>, vector<8x64xf32> -> vector<8x64xf32>
    %c0_3 = arith.constant 0 : index
    %c0_4 = arith.constant 0 : index
    %3 = vector.load %arg3[%c0_3, %c0_4] : memref<1x64xf32, #tpu.memory_space<vmem>>, vector<1x64xf32>
    %4 = vector.broadcast %3 : vector<1x64xf32> to vector<8x64xf32>
    %5 = arith.addf %2, %4 : vector<8x64xf32>
    %c0_5 = arith.constant 0 : index
    %c0_6 = arith.constant 0 : index
    %6 = vector.load %arg4[%c0_5, %c0_6] : memref<8x64xf32, #tpu.memory_space<vmem>>, vector<8x64xf32>
    tpu.vector_store %arg4[%c0_5, %c0_6], %5 {strides = array<i32>} : memref<8x64xf32, #tpu.memory_space<vmem>>, vector<8x64xf32>,
    return
  }
  func.func @transform_0(%arg0: i32) -> (i32, i32) {
    %c0_i32 = arith.constant 0 : i32
    %c0_i32_0 = arith.constant 0 : i32
    return %arg0, %c0_i32 : i32, i32
  }
  func.func @transform_1(%arg0: i32) -> (i32, i32) {
    %c0_i32 = arith.constant 0 : i32
    %c0_i32_0 = arith.constant 0 : i32
    %c0_i32_1 = arith.constant 0 : i32
    return %c0_i32, %c0_i32_0 : i32, i32
  }
  func.func @transform_2(%arg0: i32) -> (i32, i32) {
    %c0_i32 = arith.constant 0 : i32
    %c0_i32_0 = arith.constant 0 : i32
    %c0_i32_1 = arith.constant 0 : i32
    return %c0_i32, %c0_i32_0 : i32, i32
  }
  func.func @transform_3(%arg0: i32) -> (i32, i32) {
    %c0_i32 = arith.constant 0 : i32
    %c0_i32_0 = arith.constant 0 : i32
    return %arg0, %c0_i32 : i32, i32
  }
}

module attributes {stable_mosaic.version = 11 : i64} {
  func.func @_linear_kernel(%arg0: i32, %arg1: memref<8x32xf32, #tpu.memory_space<vmem>>, %arg2: memref<32x32xf32, #tpu.memory_space<vmem>>, %arg3: memref<1x32xf32, #tpu.memory_space<vmem>>, %arg4: memref<8x32xf32, #tpu.memory_space<vmem>>) attributes {dimension_semantics = [#tpu.dimension_semantics<parallel>], iteration_bounds = array<i64: 2>, scalar_prefetch = 0 : i64, scratch_operands = 0 : i64, tpu.core_type = #tpu.core_type<tc>, window_params = [{transform_indices = @transform_0, window_bounds = array<i64: 8, 32>}, {pipeline_mode = #tpu.pipeline_mode<synchronous>, transform_indices = @transform_1, window_bounds = array<i64: 32, 32>}, {pipeline_mode = #tpu.pipeline_mode<synchronous>, transform_indices = @transform_2, window_bounds = array<i64: 1, 32>}, {transform_indices = @transform_3, window_bounds = array<i64: 8, 32>}]} {
    %c0 = arith.constant 0 : index
    %c0_0 = arith.constant 0 : index
    %0 = vector.load %arg1[%c0, %c0_0] : memref<8x32xf32, #tpu.memory_space<vmem>>, vector<8x32xf32>
    %c0_1 = arith.constant 0 : index
    %c0_2 = arith.constant 0 : index
    %1 = vector.load %arg2[%c0_1, %c0_2] : memref<32x32xf32, #tpu.memory_space<vmem>>, vector<32x32xf32>
    %cst = arith.constant dense<0.000000e+00> : vector<8x32xf32>
    %2 = tpu.matmul %0, %1, %cst {dimension_numbers = #tpu.dot_dimension_numbers<[1], [0], [0], [1], [0, 0, 1, 1], [], []>} : vector<8x32xf32>, vector<32x32xf32>, vector<8x32xf32> -> vector<8x32xf32>
    %c0_3 = arith.constant 0 : index
    %c0_4 = arith.constant 0 : index
    %3 = vector.load %arg3[%c0_3, %c0_4] : memref<1x32xf32, #tpu.memory_space<vmem>>, vector<1x32xf32>
    %4 = vector.broadcast %3 : vector<1x32xf32> to vector<8x32xf32>
    %5 = arith.addf %2, %4 : vector<8x32xf32>
    %c0_5 = arith.constant 0 : index
    %c0_6 = arith.constant 0 : index
    %6 = vector.load %arg4[%c0_5, %c0_6] : memref<8x32xf32, #tpu.memory_space<vmem>>, vector<8x32xf32>
    tpu.vector_store %arg4[%c0_5, %c0_6], %5 {strides = array<i32>} : memref<8x32xf32, #tpu.memory_space<vmem>>, vector<8x32xf32>,
    return
  }
  func.func @transform_0(%arg0: i32) -> (i32, i32) {
    %c0_i32 = arith.constant 0 : i32
    %c0_i32_0 = arith.constant 0 : i32
    return %arg0, %c0_i32 : i32, i32
  }
  func.func @transform_1(%arg0: i32) -> (i32, i32) {
    %c0_i32 = arith.constant 0 : i32
    %c0_i32_0 = arith.constant 0 : i32
    %c0_i32_1 = arith.constant 0 : i32
    return %c0_i32, %c0_i32_0 : i32, i32
  }
  func.func @transform_2(%arg0: i32) -> (i32, i32) {
    %c0_i32 = arith.constant 0 : i32
    %c0_i32_0 = arith.constant 0 : i32
    %c0_i32_1 = arith.constant 0 : i32
    return %c0_i32, %c0_i32_0 : i32, i32
  }
  func.func @transform_3(%arg0: i32) -> (i32, i32) {
    %c0_i32 = arith.constant 0 : i32
    %c0_i32_0 = arith.constant 0 : i32
    return %arg0, %c0_i32 : i32, i32
  }
}

</mosaic_0001>

<llo_original>
// kernel: multihead_attention.5
$region0: #{multihead_attention.5}
  #allocation0 [shape = 'u32[]', space=smem, size = 0x4, offset = 0x4, fixed_abs, tag = 'smem constant byte address 0x4 - core index']
  #allocation1 [shape = 'u32[72,128]{1,0:T(1,128)}', space=vmem, size = 0x9000, scoped, tag = 'internal scratch']
  %s0 = inlined_call_operand.hbm [shape: f32[16,32], index: 0, kind: input, shape index: {}]
  %s1 = inlined_call_operand.hbm [shape: f32[32,64], index: 1, kind: input, shape index: {}]
  %s2 = inlined_call_operand.vmem [shape: f32[1,64], index: 2, kind: input, shape index: {}]
  %s3 = inlined_call_operand.vmem [shape: f32[16,64], index: 3, kind: output, shape index: {}]
  %s4 = sld [smem:[#allocation0]]
  $region53: #{multihead_attention.5} parent=0
    _
  %s6 = ssub.s32 1, %s4
  %s7 = scalar_select 0, %s6, %s4
  $region1: #{multihead_attention.5} parent=0
    #allocation2 [shape = 'u8[8192]{0}', space=vmem, size = 0x2000, scoped, tag = 'input window, operand 0']
    #allocation3 [shape = 's32[2]{0}', space=sflag, size = 0x8, scoped, tag = 'scoped memory for multihead_attention.5']
    #allocation4 [shape = 'u8[16384]{0}', space=vmem, size = 0x4000, scoped, tag = 'input window, operand 1, single buffered']
    #allocation5 [shape = 's32[1]{0}', space=sflag, size = 0x4, scoped, tag = 'scoped memory for multihead_attention.5']
    %8 = vsyncpa [#allocation3], 0
    %s9 = scalar_lea.sflag [#allocation3], 1
    %10 = vsyncpa %s9, 0
    %11 = vsyncpa [#allocation5], 0
    loop: start=0, step=1, limit=4
    $region2: #{multihead_attention.5} parent=1 // loop_pre_header
      _
    $region3: #{multihead_attention.5} parent=1 // loop_header
      %s13 = sphi 0, %s17
      %p14 = scmp.ge.s32.totalorder %s13, 4
      %s23 = sphi 0, %s25
      %s26 = sphi 0, %s23
      %s27 = sphi 0, %s26
      %s43 = sphi 0, %s27
      %s47 = sphi 0, %s47
      %s49 = sphi 0, %s47
      %s50 = sphi 0, %s49
      %s64 = sphi 0, %s50
      %s68 = sphi 0, %s68
      %s70 = sphi 0, %s68
      %s71 = sphi 0, %s70
      %s85 = sphi 0, %s71
      %s91 = sphi 0, %s93
      %s94 = sphi 0, %s91
      %s95 = sphi 0, %s94
      %s111 = sphi 0, %s95
    $region4: #{multihead_attention.5} parent=1 // loop_header_branch
      %16 = sbr.rel (%p14) target = $region8
    $region5: #{multihead_attention.5} parent=1 // loop_body
      %s18 = ssub.s32 %s13, 1
      %s19 = ssub.s32 %s13, 2
      %s20 = sadd.s32 %s13, 1
      %s21 = ssub.s32 %s13, %s20
      %p22 = scmp.eq.s32.totalorder %s21, 0
      %s24 = sadd.s32 %s23, 1
      %s25 = scalar_select %p22, %s23, %s24
      %p28 = pneg %p22
      %p29 = scmp.eq.s32.totalorder %s13, 1
      %p30 = por %p28, %p29
      %p31 = scmp.ne.s32.totalorder %s23, %s26
      %p32 = scmp.eq.s32.totalorder %s13, 0
      %p33 = por %p31, %p32
      %p34 = scmp.ne.s32.totalorder %s23, %s26
      %p35 = scmp.eq.s32.totalorder %s18, 1
      %p36 = por %p34, %p35
      %p37 = scmp.ne.s32.totalorder %s26, %s27
      %p38 = scmp.eq.s32.totalorder %s18, 0
      %p39 = por %p37, %p38
      %p40 = scmp.ne.s32.totalorder %s26, %s27
      %p41 = scmp.eq.s32.totalorder %s19, 1
      %p42 = por %p40, %p41
      %p44 = scmp.ne.s32.totalorder %s27, %s43
      %p45 = scmp.eq.s32.totalorder %s19, 0
      %p46 = por %p44, %p45
      %s48 = sadd.s32 %s47, 1
      %p51 = scmp.eq.s32.totalorder %s13, 1
      %p52 = scmp.ne.s32.totalorder %s47, %s49
      %p53 = scmp.eq.s32.totalorder %s13, 0
      %p54 = por %p52, %p53
      %p55 = scmp.ne.s32.totalorder %s47, %s49
      %p56 = scmp.eq.s32.totalorder %s18, 1
      %p57 = por %p55, %p56
      %p58 = scmp.ne.s32.totalorder %s49, %s50
      %p59 = scmp.eq.s32.totalorder %s18, 0
      %p60 = por %p58, %p59
      %p61 = scmp.ne.s32.totalorder %s49, %s50
      %p62 = scmp.eq.s32.totalorder %s19, 1
      %p63 = por %p61, %p62
      %p65 = scmp.ne.s32.totalorder %s50, %s64
      %p66 = scmp.eq.s32.totalorder %s19, 0
      %p67 = por %p65, %p66
      %s69 = sadd.s32 %s68, 1
      %p72 = scmp.eq.s32.totalorder %s13, 1
      %p73 = scmp.ne.s32.totalorder %s68, %s70
      %p74 = scmp.eq.s32.totalorder %s13, 0
      %p75 = por %p73, %p74
      %p76 = scmp.ne.s32.totalorder %s68, %s70
      %p77 = scmp.eq.s32.totalorder %s18, 1
      %p78 = por %p76, %p77
      %p79 = scmp.ne.s32.totalorder %s70, %s71
      %p80 = scmp.eq.s32.totalorder %s18, 0
      %p81 = por %p79, %p80
      %p82 = scmp.ne.s32.totalorder %s70, %s71
      %p83 = scmp.eq.s32.totalorder %s19, 1
      %p84 = por %p82, %p83
      %p86 = scmp.ne.s32.totalorder %s71, %s85
      %p87 = scmp.eq.s32.totalorder %s19, 0
      %p88 = por %p86, %p87
      %s89 = ssub.s32 %s13, %s20
      %p90 = scmp.eq.s32.totalorder %s89, 0
      %s92 = sadd.s32 %s91, 1
      %s93 = scalar_select %p90, %s91, %s92
      %p96 = pneg %p90
      %p97 = scmp.eq.s32.totalorder %s13, 1
      %p98 = por %p96, %p97
      %p99 = scmp.ne.s32.totalorder %s91, %s94
      %p100 = scmp.eq.s32.totalorder %s13, 0
      %p101 = por %p99, %p100
      %p102 = scmp.ne.s32.totalorder %s91, %s94
      %p103 = scmp.eq.s32.totalorder %s18, 1
      %p104 = por %p102, %p103
      %p105 = scmp.ne.s32.totalorder %s94, %s95
      %p106 = scmp.eq.s32.totalorder %s18, 0
      %p107 = por %p105, %p106
      %p108 = scmp.ne.s32.totalorder %s94, %s95
      %p109 = scmp.eq.s32.totalorder %s19, 1
      %p110 = por %p108, %p109
      %p112 = scmp.ne.s32.totalorder %s95, %s111
      %p113 = scmp.eq.s32.totalorder %s19, 0
      %p114 = por %p112, %p113
      %p115 = scmp.le.s32.totalorder 1, %s13
      %p116 = scmp.lt.s32.totalorder %s13, 3
      %p117 = pnand %p115, %p116
      %p118 = pneg %p117
      // Predicated region
      $region9: #{multihead_attention.5} parent=5 // pred_check
        _
      $region10: #{multihead_attention.5} parent=5 // pred_check_branch
        %120 = sbr.rel (%p117) target = $region12
      $region11: #{multihead_attention.5} parent=5 // pred_region
        %s121 = ssub.s32 %s13, 1
        // Predicated region
        $region13: #{multihead_attention.5} parent=11 // pred_check
          %p122 = pneg %p60
        $region14: #{multihead_attention.5} parent=11 // pred_check_branch
          %124 = sbr.rel (%p122) target = $region16
        $region15: #{multihead_attention.5} parent=11 // pred_region
          %126 = vsyncadd [#allocation5], 0
          %s127 = sshll.u32 %s1, 4
          %s128 = int_to_ptr.hbm [resolvable:$true] %s127
          %s129 = sshll.u32 [#allocation4], 4
          %s130 = int_to_ptr.vmem [resolvable:$true] %s129
          %135 = dma.hbm_to_vmem [thread:$0]  %s128, 512, %s130, [#allocation5], 128, 128, 8
        $region16: #{multihead_attention.5} parent=11 // pred_fallthru
          _
        // Predicated region
        $region17: #{multihead_attention.5} parent=11 // pred_check
          %p136 = pneg %p81
        $region18: #{multihead_attention.5} parent=11 // pred_check_branch
          %138 = sbr.rel (%p136) target = $region20
        $region19: #{multihead_attention.5} parent=11 // pred_region
          _
        $region20: #{multihead_attention.5} parent=11 // pred_fallthru
          _
      $region12: #{multihead_attention.5} parent=5 // pred_fallthru
        _
      %p139 = scmp.lt.s32.totalorder %s13, 2
      // Predicated region
      $region21: #{multihead_attention.5} parent=5 // pred_check
        %p140 = pneg %p139
      $region22: #{multihead_attention.5} parent=5 // pred_check_branch
        %142 = sbr.rel (%p140) target = $region24
      $region23: #{multihead_attention.5} parent=5 // pred_region
        // Predicated region
        $region25: #{multihead_attention.5} parent=23 // pred_check
          %p143 = pneg %p33
        $region26: #{multihead_attention.5} parent=23 // pred_check_branch
          %145 = sbr.rel (%p143) target = $region28
        $region27: #{multihead_attention.5} parent=23 // pred_region
          %s146 = sand.u32 %s23, 1
          %s147 = scalar_lea.sflag [#allocation3], %s146
          %s148 = sand.u32 %s23, 1
          %s149 = smul.addr %s148, 8
          %s150 = scalar_lea.vmem [#allocation2], %s149
          %152 = vsyncadd %s147, 0
          %s153 = smul.addr %s13, 8
          %s154 = scalar_lea.hbm %s0, %s153
          %s156 = sshll.u32 %s154, 4
          %s157 = int_to_ptr.hbm [resolvable:$true] %s156
          %s158 = sshll.u32 %s150, 4
          %s159 = int_to_ptr.vmem [resolvable:$true] %s158
          %161 = dma.hbm_to_vmem [thread:$0]  %s157, 128, %s159, %s147
        $region28: #{multihead_attention.5} parent=23 // pred_fallthru
          _
      $region24: #{multihead_attention.5} parent=5 // pred_fallthru
        _
      %p162 = scmp.le.s32.totalorder 1, %s13
      %p163 = scmp.lt.s32.totalorder %s13, 3
      %p164 = pnand %p162, %p163
      %p165 = pneg %p164
      // Predicated region
      $region29: #{multihead_attention.5} parent=5 // pred_check
        _
      $region30: #{multihead_attention.5} parent=5 // pred_check_branch
        %167 = sbr.rel (%p164) target = $region32
      $region31: #{multihead_attention.5} parent=5 // pred_region
        %s168 = ssub.s32 %s13, 1
        %s169 = sand.u32 %s26, 1
        %s170 = scalar_lea.sflag [#allocation3], %s169
        %s171 = sand.u32 %s26, 1
        %s172 = smul.addr %s171, 8
        %s173 = scalar_lea.vmem [#allocation2], %s172
        // Predicated region
        $region33: #{multihead_attention.5} parent=31 // pred_check
          %p174 = pneg %p39
        $region34: #{multihead_attention.5} parent=31 // pred_check_branch
          %176 = sbr.rel (%p174) target = $region36
        $region35: #{multihead_attention.5} parent=31 // pred_region
          %178 = dma.done %s170, 128
        $region36: #{multihead_attention.5} parent=31 // pred_fallthru
          _
        // Predicated region
        $region37: #{multihead_attention.5} parent=31 // pred_check
          %p179 = pneg %p60
        $region38: #{multihead_attention.5} parent=31 // pred_check_branch
          %181 = sbr.rel (%p179) target = $region40
        $region39: #{multihead_attention.5} parent=31 // pred_region
          %183 = dma.done [#allocation5], 512
        $region40: #{multihead_attention.5} parent=31 // pred_fallthru
          _
        %s184 = sand.u32 %s26, 1
        %s185 = scalar_lea.sflag [#allocation3], %s184
        %s186 = sand.u32 %s26, 1
        %s187 = smul.addr %s186, 8
        %s188 = scalar_lea.vmem [#allocation2], %s187
        %p189 = pneg %p39
        %p190 = pneg %p36
        %p191 = pneg %p60
        %p192 = pneg %p57
        %p193 = pneg %p81
        %p194 = pneg %p78
        %p195 = pneg %p107
        %p196 = pneg %p104
        %p197 = scmp.lt.s32.totalorder %s18, 1
        %s198 = scalar_select %p197, %s18, 1
        %s199 = smul.addr %s198, 8
        %s200 = scalar_lea.vmem %s3, %s199
        %p201 = scmp.lt.s32.totalorder %s18, 1
        %s202 = scalar_select %p201, %s18, 1
        %s203 = smul.addr %s202, 8
        %s204 = scalar_lea.vmem %s3, %s203
        %v205 = vld [vmem:[%s173] sm:$0xff]
        %v206 = vld [vmem:[#allocation4] sm:$0xff]
        %v207 = vld [vmem:[#allocation4 + $0x8] sm:$0xff]
        %v208 = vld [vmem:[#allocation4 + $0x10] sm:$0xff]
        %v209 = vld [vmem:[#allocation4 + $0x18] sm:$0xff]
        %v210 = vld [vmem:[%s2] sm:$0x1]
        %v212 = vperm.slane %v210, 0
        %vm214 = vcmask 261120
        %v216 = vsel %vm214, %v205, 0
        %218 = vmatpush.msra.mxu0 0.0
        %219 = vmatpush.msra.mxu0 0.0
        %220 = vmatpush.msra.mxu0 0.0
        %221 = vmatpush.msra.mxu0 0.0
        %222 = vmatpush.msra.mxu0 0.0
        %223 = vmatpush.msra.mxu0 0.0
        %224 = vmatpush.msra.mxu0 0.0
        %225 = vmatpush.msra.mxu0 0.0
        %226 = vmatpush.msra.mxu0 0.0
        %227 = vmatpush.msra.mxu0 0.0
        %228 = vmatpush.msra.mxu0 0.0
        %229 = vmatpush.msra.mxu0 0.0
        %230 = vmatpush.msra.mxu0 %v209
        %231 = vmatpush.msra.mxu0 %v208
        %232 = vmatpush.msra.mxu0 %v207
        %233 = vmatpush.msra.mxu0 %v206
        %234 = vmatmul.f32.gmra.mxu0 %v216
        %v235 = vpop.f32.mrf.mxu0
        %v236 = vadd.f32 %v212, %v235
        %237 = vdwg.mxu0
        %vm238 = vcmask 523264
        %239 = vst.msk [vmem:[%s204] sm:$0xff] %vm238, %v236
        %p240 = scmp.lt.s32.totalorder %s18, 1
        %s241 = scalar_select %p240, %s18, 1
        %s242 = smul.addr %s241, 8
        %s243 = scalar_lea.vmem %s3, %s242
        // Predicated region
        $region41: #{multihead_attention.5} parent=31 // pred_check
          %p244 = pneg %p104
        $region42: #{multihead_attention.5} parent=31 // pred_check_branch
          %246 = sbr.rel (%p244) target = $region44
        $region43: #{multihead_attention.5} parent=31 // pred_region
          _
        $region44: #{multihead_attention.5} parent=31 // pred_fallthru
          _
      $region32: #{multihead_attention.5} parent=5 // pred_fallthru
        _
      %p247 = scmp.le.s32.totalorder 2, %s13
      // Predicated region
      $region45: #{multihead_attention.5} parent=5 // pred_check
        %p248 = pneg %p247
      $region46: #{multihead_attention.5} parent=5 // pred_check_branch
        %250 = sbr.rel (%p248) target = $region48
      $region47: #{multihead_attention.5} parent=5 // pred_region
        %s251 = ssub.s32 %s13, 2
        // Predicated region
        $region49: #{multihead_attention.5} parent=47 // pred_check
          %p252 = pneg %p110
        $region50: #{multihead_attention.5} parent=47 // pred_check_branch
          %254 = sbr.rel (%p252) target = $region52
        $region51: #{multihead_attention.5} parent=47 // pred_region
          %p255 = scmp.lt.s32.totalorder %s19, 1
          %s256 = scalar_select %p255, %s19, 1
          %s257 = smul.addr %s256, 8
          %s258 = scalar_lea.vmem %s3, %s257
        $region52: #{multihead_attention.5} parent=47 // pred_fallthru
          _
      $region48: #{multihead_attention.5} parent=5 // pred_fallthru
        _
    $region6: #{multihead_attention.5} parent=1 // loop_footer
      %s17 = sadd.s32 1, %s13
    $region7: #{multihead_attention.5} parent=1 // loop_footer_branch
      %12 = sbr.rel target = $region3
    $region8: #{multihead_attention.5} parent=1 // loop_exit
      _
    %259 = vsyncpa [#allocation3], 1
    %s260 = scalar_lea.sflag [#allocation3], 1
    %261 = vsyncpa %s260, 1
    %262 = vsyncpa [#allocation5], 1

// kernel: multihead_attention.4
$region0: #{multihead_attention.4}
  #allocation0 [shape = 'u32[]', space=smem, size = 0x4, offset = 0x4, fixed_abs, tag = 'smem constant byte address 0x4 - core index']
  #allocation1 [shape = 'u32[72,128]{1,0:T(1,128)}', space=vmem, size = 0x9000, scoped, tag = 'internal scratch']
  %s0 = inlined_call_operand.hbm [shape: f32[16,32], index: 0, kind: input, shape index: {}]
  %s1 = inlined_call_operand.hbm [shape: f32[32,32], index: 1, kind: input, shape index: {}]
  %s2 = inlined_call_operand.vmem [shape: f32[1,32], index: 2, kind: input, shape index: {}]
  %s3 = inlined_call_operand.vmem [shape: f32[16,32], index: 3, kind: output, shape index: {}]
  %s4 = sld [smem:[#allocation0]]
  $region53: #{multihead_attention.4} parent=0
    _
  %s6 = ssub.s32 1, %s4
  %s7 = scalar_select 0, %s6, %s4
  $region1: #{multihead_attention.4} parent=0
    #allocation2 [shape = 'u8[8192]{0}', space=vmem, size = 0x2000, scoped, tag = 'input window, operand 0']
    #allocation3 [shape = 's32[2]{0}', space=sflag, size = 0x8, scoped, tag = 'scoped memory for multihead_attention.4']
    #allocation4 [shape = 'u8[16384]{0}', space=vmem, size = 0x4000, scoped, tag = 'input window, operand 1, single buffered']
    #allocation5 [shape = 's32[1]{0}', space=sflag, size = 0x4, scoped, tag = 'scoped memory for multihead_attention.4']
    %8 = vsyncpa [#allocation3], 0
    %s9 = scalar_lea.sflag [#allocation3], 1
    %10 = vsyncpa %s9, 0
    %11 = vsyncpa [#allocation5], 0
    loop: start=0, step=1, limit=4
    $region2: #{multihead_attention.4} parent=1 // loop_pre_header
      _
    $region3: #{multihead_attention.4} parent=1 // loop_header
      %s13 = sphi 0, %s17
      %p14 = scmp.ge.s32.totalorder %s13, 4
      %s23 = sphi 0, %s25
      %s26 = sphi 0, %s23
      %s27 = sphi 0, %s26
      %s43 = sphi 0, %s27
      %s47 = sphi 0, %s47
      %s49 = sphi 0, %s47
      %s50 = sphi 0, %s49
      %s64 = sphi 0, %s50
      %s68 = sphi 0, %s68
      %s70 = sphi 0, %s68
      %s71 = sphi 0, %s70
      %s85 = sphi 0, %s71
      %s91 = sphi 0, %s93
      %s94 = sphi 0, %s91
      %s95 = sphi 0, %s94
      %s111 = sphi 0, %s95
    $region4: #{multihead_attention.4} parent=1 // loop_header_branch
      %16 = sbr.rel (%p14) target = $region8
    $region5: #{multihead_attention.4} parent=1 // loop_body
      %s18 = ssub.s32 %s13, 1
      %s19 = ssub.s32 %s13, 2
      %s20 = sadd.s32 %s13, 1
      %s21 = ssub.s32 %s13, %s20
      %p22 = scmp.eq.s32.totalorder %s21, 0
      %s24 = sadd.s32 %s23, 1
      %s25 = scalar_select %p22, %s23, %s24
      %p28 = pneg %p22
      %p29 = scmp.eq.s32.totalorder %s13, 1
      %p30 = por %p28, %p29
      %p31 = scmp.ne.s32.totalorder %s23, %s26
      %p32 = scmp.eq.s32.totalorder %s13, 0
      %p33 = por %p31, %p32
      %p34 = scmp.ne.s32.totalorder %s23, %s26
      %p35 = scmp.eq.s32.totalorder %s18, 1
      %p36 = por %p34, %p35
      %p37 = scmp.ne.s32.totalorder %s26, %s27
      %p38 = scmp.eq.s32.totalorder %s18, 0
      %p39 = por %p37, %p38
      %p40 = scmp.ne.s32.totalorder %s26, %s27
      %p41 = scmp.eq.s32.totalorder %s19, 1
      %p42 = por %p40, %p41
      %p44 = scmp.ne.s32.totalorder %s27, %s43
      %p45 = scmp.eq.s32.totalorder %s19, 0
      %p46 = por %p44, %p45
      %s48 = sadd.s32 %s47, 1
      %p51 = scmp.eq.s32.totalorder %s13, 1
      %p52 = scmp.ne.s32.totalorder %s47, %s49
      %p53 = scmp.eq.s32.totalorder %s13, 0
      %p54 = por %p52, %p53
      %p55 = scmp.ne.s32.totalorder %s47, %s49
      %p56 = scmp.eq.s32.totalorder %s18, 1
      %p57 = por %p55, %p56
      %p58 = scmp.ne.s32.totalorder %s49, %s50
      %p59 = scmp.eq.s32.totalorder %s18, 0
      %p60 = por %p58, %p59
      %p61 = scmp.ne.s32.totalorder %s49, %s50
      %p62 = scmp.eq.s32.totalorder %s19, 1
      %p63 = por %p61, %p62
      %p65 = scmp.ne.s32.totalorder %s50, %s64
      %p66 = scmp.eq.s32.totalorder %s19, 0
      %p67 = por %p65, %p66
      %s69 = sadd.s32 %s68, 1
      %p72 = scmp.eq.s32.totalorder %s13, 1
      %p73 = scmp.ne.s32.totalorder %s68, %s70
      %p74 = scmp.eq.s32.totalorder %s13, 0
      %p75 = por %p73, %p74
      %p76 = scmp.ne.s32.totalorder %s68, %s70
      %p77 = scmp.eq.s32.totalorder %s18, 1
      %p78 = por %p76, %p77
      %p79 = scmp.ne.s32.totalorder %s70, %s71
      %p80 = scmp.eq.s32.totalorder %s18, 0
      %p81 = por %p79, %p80
      %p82 = scmp.ne.s32.totalorder %s70, %s71
      %p83 = scmp.eq.s32.totalorder %s19, 1
      %p84 = por %p82, %p83
      %p86 = scmp.ne.s32.totalorder %s71, %s85
      %p87 = scmp.eq.s32.totalorder %s19, 0
      %p88 = por %p86, %p87
      %s89 = ssub.s32 %s13, %s20
      %p90 = scmp.eq.s32.totalorder %s89, 0
      %s92 = sadd.s32 %s91, 1
      %s93 = scalar_select %p90, %s91, %s92
      %p96 = pneg %p90
      %p97 = scmp.eq.s32.totalorder %s13, 1
      %p98 = por %p96, %p97
      %p99 = scmp.ne.s32.totalorder %s91, %s94
      %p100 = scmp.eq.s32.totalorder %s13, 0
      %p101 = por %p99, %p100
      %p102 = scmp.ne.s32.totalorder %s91, %s94
      %p103 = scmp.eq.s32.totalorder %s18, 1
      %p104 = por %p102, %p103
      %p105 = scmp.ne.s32.totalorder %s94, %s95
      %p106 = scmp.eq.s32.totalorder %s18, 0
      %p107 = por %p105, %p106
      %p108 = scmp.ne.s32.totalorder %s94, %s95
      %p109 = scmp.eq.s32.totalorder %s19, 1
      %p110 = por %p108, %p109
      %p112 = scmp.ne.s32.totalorder %s95, %s111
      %p113 = scmp.eq.s32.totalorder %s19, 0
      %p114 = por %p112, %p113
      %p115 = scmp.le.s32.totalorder 1, %s13
      %p116 = scmp.lt.s32.totalorder %s13, 3
      %p117 = pnand %p115, %p116
      %p118 = pneg %p117
      // Predicated region
      $region9: #{multihead_attention.4} parent=5 // pred_check
        _
      $region10: #{multihead_attention.4} parent=5 // pred_check_branch
        %120 = sbr.rel (%p117) target = $region12
      $region11: #{multihead_attention.4} parent=5 // pred_region
        %s121 = ssub.s32 %s13, 1
        // Predicated region
        $region13: #{multihead_attention.4} parent=11 // pred_check
          %p122 = pneg %p60
        $region14: #{multihead_attention.4} parent=11 // pred_check_branch
          %124 = sbr.rel (%p122) target = $region16
        $region15: #{multihead_attention.4} parent=11 // pred_region
          %126 = vsyncadd [#allocation5], 0
          %s127 = sshll.u32 %s1, 4
          %s128 = int_to_ptr.hbm [resolvable:$true] %s127
          %s129 = sshll.u32 [#allocation4], 4
          %s130 = int_to_ptr.vmem [resolvable:$true] %s129
          %135 = dma.hbm_to_vmem [thread:$0]  %s128, 512, %s130, [#allocation5], 128, 128, 8
        $region16: #{multihead_attention.4} parent=11 // pred_fallthru
          _
        // Predicated region
        $region17: #{multihead_attention.4} parent=11 // pred_check
          %p136 = pneg %p81
        $region18: #{multihead_attention.4} parent=11 // pred_check_branch
          %138 = sbr.rel (%p136) target = $region20
        $region19: #{multihead_attention.4} parent=11 // pred_region
          _
        $region20: #{multihead_attention.4} parent=11 // pred_fallthru
          _
      $region12: #{multihead_attention.4} parent=5 // pred_fallthru
        _
      %p139 = scmp.lt.s32.totalorder %s13, 2
      // Predicated region
      $region21: #{multihead_attention.4} parent=5 // pred_check
        %p140 = pneg %p139
      $region22: #{multihead_attention.4} parent=5 // pred_check_branch
        %142 = sbr.rel (%p140) target = $region24
      $region23: #{multihead_attention.4} parent=5 // pred_region
        // Predicated region
        $region25: #{multihead_attention.4} parent=23 // pred_check
          %p143 = pneg %p33
        $region26: #{multihead_attention.4} parent=23 // pred_check_branch
          %145 = sbr.rel (%p143) target = $region28
        $region27: #{multihead_attention.4} parent=23 // pred_region
          %s146 = sand.u32 %s23, 1
          %s147 = scalar_lea.sflag [#allocation3], %s146
          %s148 = sand.u32 %s23, 1
          %s149 = smul.addr %s148, 8
          %s150 = scalar_lea.vmem [#allocation2], %s149
          %152 = vsyncadd %s147, 0
          %s153 = smul.addr %s13, 8
          %s154 = scalar_lea.hbm %s0, %s153
          %s156 = sshll.u32 %s154, 4
          %s157 = int_to_ptr.hbm [resolvable:$true] %s156
          %s158 = sshll.u32 %s150, 4
          %s159 = int_to_ptr.vmem [resolvable:$true] %s158
          %161 = dma.hbm_to_vmem [thread:$0]  %s157, 128, %s159, %s147
        $region28: #{multihead_attention.4} parent=23 // pred_fallthru
          _
      $region24: #{multihead_attention.4} parent=5 // pred_fallthru
        _
      %p162 = scmp.le.s32.totalorder 1, %s13
      %p163 = scmp.lt.s32.totalorder %s13, 3
      %p164 = pnand %p162, %p163
      %p165 = pneg %p164
      // Predicated region
      $region29: #{multihead_attention.4} parent=5 // pred_check
        _
      $region30: #{multihead_attention.4} parent=5 // pred_check_branch
        %167 = sbr.rel (%p164) target = $region32
      $region31: #{multihead_attention.4} parent=5 // pred_region
        %s168 = ssub.s32 %s13, 1
        %s169 = sand.u32 %s26, 1
        %s170 = scalar_lea.sflag [#allocation3], %s169
        %s171 = sand.u32 %s26, 1
        %s172 = smul.addr %s171, 8
        %s173 = scalar_lea.vmem [#allocation2], %s172
        // Predicated region
        $region33: #{multihead_attention.4} parent=31 // pred_check
          %p174 = pneg %p39
        $region34: #{multihead_attention.4} parent=31 // pred_check_branch
          %176 = sbr.rel (%p174) target = $region36
        $region35: #{multihead_attention.4} parent=31 // pred_region
          %178 = dma.done %s170, 128
        $region36: #{multihead_attention.4} parent=31 // pred_fallthru
          _
        // Predicated region
        $region37: #{multihead_attention.4} parent=31 // pred_check
          %p179 = pneg %p60
        $region38: #{multihead_attention.4} parent=31 // pred_check_branch
          %181 = sbr.rel (%p179) target = $region40
        $region39: #{multihead_attention.4} parent=31 // pred_region
          %183 = dma.done [#allocation5], 512
        $region40: #{multihead_attention.4} parent=31 // pred_fallthru
          _
        %s184 = sand.u32 %s26, 1
        %s185 = scalar_lea.sflag [#allocation3], %s184
        %s186 = sand.u32 %s26, 1
        %s187 = smul.addr %s186, 8
        %s188 = scalar_lea.vmem [#allocation2], %s187
        %p189 = pneg %p39
        %p190 = pneg %p36
        %p191 = pneg %p60
        %p192 = pneg %p57
        %p193 = pneg %p81
        %p194 = pneg %p78
        %p195 = pneg %p107
        %p196 = pneg %p104
        %p197 = scmp.lt.s32.totalorder %s18, 1
        %s198 = scalar_select %p197, %s18, 1
        %s199 = smul.addr %s198, 8
        %s200 = scalar_lea.vmem %s3, %s199
        %p201 = scmp.lt.s32.totalorder %s18, 1
        %s202 = scalar_select %p201, %s18, 1
        %s203 = smul.addr %s202, 8
        %s204 = scalar_lea.vmem %s3, %s203
        %v205 = vld [vmem:[%s173] sm:$0xff]
        %v206 = vld [vmem:[#allocation4] sm:$0xff]
        %v207 = vld [vmem:[#allocation4 + $0x8] sm:$0xff]
        %v208 = vld [vmem:[#allocation4 + $0x10] sm:$0xff]
        %v209 = vld [vmem:[#allocation4 + $0x18] sm:$0xff]
        %v210 = vld [vmem:[%s2] sm:$0x1]
        %v212 = vperm.slane %v210, 0
        %vm214 = vcmask 261120
        %v216 = vsel %vm214, %v205, 0
        %218 = vmatpush.msra.mxu0 0.0
        %219 = vmatpush.msra.mxu0 0.0
        %220 = vmatpush.msra.mxu0 0.0
        %221 = vmatpush.msra.mxu0 0.0
        %222 = vmatpush.msra.mxu0 0.0
        %223 = vmatpush.msra.mxu0 0.0
        %224 = vmatpush.msra.mxu0 0.0
        %225 = vmatpush.msra.mxu0 0.0
        %226 = vmatpush.msra.mxu0 0.0
        %227 = vmatpush.msra.mxu0 0.0
        %228 = vmatpush.msra.mxu0 0.0
        %229 = vmatpush.msra.mxu0 0.0
        %230 = vmatpush.msra.mxu0 %v209
        %231 = vmatpush.msra.mxu0 %v208
        %232 = vmatpush.msra.mxu0 %v207
        %233 = vmatpush.msra.mxu0 %v206
        %234 = vmatmul.f32.gmra.mxu0 %v216
        %v235 = vpop.f32.mrf.mxu0
        %v236 = vadd.f32 %v212, %v235
        %237 = vdwg.mxu0
        %238 = vst.msk [vmem:[%s204] sm:$0xff] %vm214, %v236
        %p239 = scmp.lt.s32.totalorder %s18, 1
        %s240 = scalar_select %p239, %s18, 1
        %s241 = smul.addr %s240, 8
        %s242 = scalar_lea.vmem %s3, %s241
        // Predicated region
        $region41: #{multihead_attention.4} parent=31 // pred_check
          %p243 = pneg %p104
        $region42: #{multihead_attention.4} parent=31 // pred_check_branch
          %245 = sbr.rel (%p243) target = $region44
        $region43: #{multihead_attention.4} parent=31 // pred_region
          _
        $region44: #{multihead_attention.4} parent=31 // pred_fallthru
          _
      $region32: #{multihead_attention.4} parent=5 // pred_fallthru
        _
      %p246 = scmp.le.s32.totalorder 2, %s13
      // Predicated region
      $region45: #{multihead_attention.4} parent=5 // pred_check
        %p247 = pneg %p246
      $region46: #{multihead_attention.4} parent=5 // pred_check_branch
        %249 = sbr.rel (%p247) target = $region48
      $region47: #{multihead_attention.4} parent=5 // pred_region
        %s250 = ssub.s32 %s13, 2
        // Predicated region
        $region49: #{multihead_attention.4} parent=47 // pred_check
          %p251 = pneg %p110
        $region50: #{multihead_attention.4} parent=47 // pred_check_branch
          %253 = sbr.rel (%p251) target = $region52
        $region51: #{multihead_attention.4} parent=47 // pred_region
          %p254 = scmp.lt.s32.totalorder %s19, 1
          %s255 = scalar_select %p254, %s19, 1
          %s256 = smul.addr %s255, 8
          %s257 = scalar_lea.vmem %s3, %s256
        $region52: #{multihead_attention.4} parent=47 // pred_fallthru
          _
      $region48: #{multihead_attention.4} parent=5 // pred_fallthru
        _
    $region6: #{multihead_attention.4} parent=1 // loop_footer
      %s17 = sadd.s32 1, %s13
    $region7: #{multihead_attention.4} parent=1 // loop_footer_branch
      %12 = sbr.rel target = $region3
    $region8: #{multihead_attention.4} parent=1 // loop_exit
      _
    %258 = vsyncpa [#allocation3], 1
    %s259 = scalar_lea.sflag [#allocation3], 1
    %260 = vsyncpa %s259, 1
    %261 = vsyncpa [#allocation5], 1

// kernel: multihead_attention.7
$region0: #{multihead_attention.7}
  #allocation0 [shape = 'u32[]', space=smem, size = 0x4, offset = 0x4, fixed_abs, tag = 'smem constant byte address 0x4 - core index']
  #allocation1 [shape = 'u32[72,128]{1,0:T(1,128)}', space=vmem, size = 0x9000, scoped, tag = 'internal scratch']
  %s0 = inlined_call_operand.vmem [shape: f32[16,32], index: 0, kind: input, shape index: {}]
  %s1 = inlined_call_operand.hbm [shape: f32[32,32], index: 1, kind: input, shape index: {}]
  %s2 = inlined_call_operand.vmem [shape: f32[1,32], index: 2, kind: input, shape index: {}]
  %s3 = inlined_call_operand.hbm [shape: f32[16,32], index: 3, kind: output, shape index: {}]
  %s4 = sld [smem:[#allocation0]]
  $region49: #{multihead_attention.7} parent=0
    _
  %s6 = ssub.s32 1, %s4
  %s7 = scalar_select 0, %s6, %s4
  $region1: #{multihead_attention.7} parent=0
    #allocation2 [shape = 'u8[16384]{0}', space=vmem, size = 0x4000, scoped, tag = 'input window, operand 1, single buffered']
    #allocation3 [shape = 's32[2]{0}', space=sflag, size = 0x8, scoped, tag = 'scoped memory for multihead_attention.7']
    #allocation4 [shape = 's32[2]{0}', space=sflag, size = 0x8, scoped, tag = 'scoped memory for multihead_attention.7']
    #allocation5 [shape = 'u8[8192]{0}', space=vmem, size = 0x2000, scoped, tag = 'output window, operand 0']
    %8 = vsyncpa [#allocation3], 0
    %9 = vsyncpa [#allocation4], 0
    %s10 = scalar_lea.sflag [#allocation4], 1
    %11 = vsyncpa %s10, 0
    loop: start=0, step=1, limit=4
    $region2: #{multihead_attention.7} parent=1 // loop_pre_header
      _
    $region3: #{multihead_attention.7} parent=1 // loop_header
      %s13 = sphi 0, %s17
      %p14 = scmp.ge.s32.totalorder %s13, 4
      %s23 = sphi 0, %s25
      %s26 = sphi 0, %s23
      %s27 = sphi 0, %s26
      %s43 = sphi 0, %s27
      %s47 = sphi 0, %s47
      %s49 = sphi 0, %s47
      %s50 = sphi 0, %s49
      %s64 = sphi 0, %s50
      %s68 = sphi 0, %s68
      %s70 = sphi 0, %s68
      %s71 = sphi 0, %s70
      %s85 = sphi 0, %s71
      %s91 = sphi 0, %s93
      %s94 = sphi 0, %s91
      %s95 = sphi 0, %s94
      %s111 = sphi 0, %s95
    $region4: #{multihead_attention.7} parent=1 // loop_header_branch
      %16 = sbr.rel (%p14) target = $region8
    $region5: #{multihead_attention.7} parent=1 // loop_body
      %s18 = ssub.s32 %s13, 1
      %s19 = ssub.s32 %s13, 2
      %s20 = sadd.s32 %s13, 1
      %s21 = ssub.s32 %s13, %s20
      %p22 = scmp.eq.s32.totalorder %s21, 0
      %s24 = sadd.s32 %s23, 1
      %s25 = scalar_select %p22, %s23, %s24
      %p28 = pneg %p22
      %p29 = scmp.eq.s32.totalorder %s13, 1
      %p30 = por %p28, %p29
      %p31 = scmp.ne.s32.totalorder %s23, %s26
      %p32 = scmp.eq.s32.totalorder %s13, 0
      %p33 = por %p31, %p32
      %p34 = scmp.ne.s32.totalorder %s23, %s26
      %p35 = scmp.eq.s32.totalorder %s18, 1
      %p36 = por %p34, %p35
      %p37 = scmp.ne.s32.totalorder %s26, %s27
      %p38 = scmp.eq.s32.totalorder %s18, 0
      %p39 = por %p37, %p38
      %p40 = scmp.ne.s32.totalorder %s26, %s27
      %p41 = scmp.eq.s32.totalorder %s19, 1
      %p42 = por %p40, %p41
      %p44 = scmp.ne.s32.totalorder %s27, %s43
      %p45 = scmp.eq.s32.totalorder %s19, 0
      %p46 = por %p44, %p45
      %s48 = sadd.s32 %s47, 1
      %p51 = scmp.eq.s32.totalorder %s13, 1
      %p52 = scmp.ne.s32.totalorder %s47, %s49
      %p53 = scmp.eq.s32.totalorder %s13, 0
      %p54 = por %p52, %p53
      %p55 = scmp.ne.s32.totalorder %s47, %s49
      %p56 = scmp.eq.s32.totalorder %s18, 1
      %p57 = por %p55, %p56
      %p58 = scmp.ne.s32.totalorder %s49, %s50
      %p59 = scmp.eq.s32.totalorder %s18, 0
      %p60 = por %p58, %p59
      %p61 = scmp.ne.s32.totalorder %s49, %s50
      %p62 = scmp.eq.s32.totalorder %s19, 1
      %p63 = por %p61, %p62
      %p65 = scmp.ne.s32.totalorder %s50, %s64
      %p66 = scmp.eq.s32.totalorder %s19, 0
      %p67 = por %p65, %p66
      %s69 = sadd.s32 %s68, 1
      %p72 = scmp.eq.s32.totalorder %s13, 1
      %p73 = scmp.ne.s32.totalorder %s68, %s70
      %p74 = scmp.eq.s32.totalorder %s13, 0
      %p75 = por %p73, %p74
      %p76 = scmp.ne.s32.totalorder %s68, %s70
      %p77 = scmp.eq.s32.totalorder %s18, 1
      %p78 = por %p76, %p77
      %p79 = scmp.ne.s32.totalorder %s70, %s71
      %p80 = scmp.eq.s32.totalorder %s18, 0
      %p81 = por %p79, %p80
      %p82 = scmp.ne.s32.totalorder %s70, %s71
      %p83 = scmp.eq.s32.totalorder %s19, 1
      %p84 = por %p82, %p83
      %p86 = scmp.ne.s32.totalorder %s71, %s85
      %p87 = scmp.eq.s32.totalorder %s19, 0
      %p88 = por %p86, %p87
      %s89 = ssub.s32 %s13, %s20
      %p90 = scmp.eq.s32.totalorder %s89, 0
      %s92 = sadd.s32 %s91, 1
      %s93 = scalar_select %p90, %s91, %s92
      %p96 = pneg %p90
      %p97 = scmp.eq.s32.totalorder %s13, 1
      %p98 = por %p96, %p97
      %p99 = scmp.ne.s32.totalorder %s91, %s94
      %p100 = scmp.eq.s32.totalorder %s13, 0
      %p101 = por %p99, %p100
      %p102 = scmp.ne.s32.totalorder %s91, %s94
      %p103 = scmp.eq.s32.totalorder %s18, 1
      %p104 = por %p102, %p103
      %p105 = scmp.ne.s32.totalorder %s94, %s95
      %p106 = scmp.eq.s32.totalorder %s18, 0
      %p107 = por %p105, %p106
      %p108 = scmp.ne.s32.totalorder %s94, %s95
      %p109 = scmp.eq.s32.totalorder %s19, 1
      %p110 = por %p108, %p109
      %p112 = scmp.ne.s32.totalorder %s95, %s111
      %p113 = scmp.eq.s32.totalorder %s19, 0
      %p114 = por %p112, %p113
      %p115 = scmp.le.s32.totalorder 1, %s13
      %p116 = scmp.lt.s32.totalorder %s13, 3
      %p117 = pnand %p115, %p116
      %p118 = pneg %p117
      // Predicated region
      $region9: #{multihead_attention.7} parent=5 // pred_check
        _
      $region10: #{multihead_attention.7} parent=5 // pred_check_branch
        %120 = sbr.rel (%p117) target = $region12
      $region11: #{multihead_attention.7} parent=5 // pred_region
        %s121 = ssub.s32 %s13, 1
        // Predicated region
        $region13: #{multihead_attention.7} parent=11 // pred_check
          %p122 = pneg %p60
        $region14: #{multihead_attention.7} parent=11 // pred_check_branch
          %124 = sbr.rel (%p122) target = $region16
        $region15: #{multihead_attention.7} parent=11 // pred_region
          %126 = vsyncadd [#allocation3], 0
          %s127 = sshll.u32 %s1, 4
          %s128 = int_to_ptr.hbm [resolvable:$true] %s127
          %s129 = sshll.u32 [#allocation2], 4
          %s130 = int_to_ptr.vmem [resolvable:$true] %s129
          %135 = dma.hbm_to_vmem [thread:$0]  %s128, 512, %s130, [#allocation3], 128, 128, 8
        $region16: #{multihead_attention.7} parent=11 // pred_fallthru
          _
        // Predicated region
        $region17: #{multihead_attention.7} parent=11 // pred_check
          %p136 = pneg %p81
        $region18: #{multihead_attention.7} parent=11 // pred_check_branch
          %138 = sbr.rel (%p136) target = $region20
        $region19: #{multihead_attention.7} parent=11 // pred_region
          _
        $region20: #{multihead_attention.7} parent=11 // pred_fallthru
          _
      $region12: #{multihead_attention.7} parent=5 // pred_fallthru
        _
      %p139 = scmp.lt.s32.totalorder %s13, 2
      // Predicated region
      $region21: #{multihead_attention.7} parent=5 // pred_check
        %p140 = pneg %p139
      $region22: #{multihead_attention.7} parent=5 // pred_check_branch
        %142 = sbr.rel (%p140) target = $region24
      $region23: #{multihead_attention.7} parent=5 // pred_region
        // Predicated region
        $region25: #{multihead_attention.7} parent=23 // pred_check
          %p143 = pneg %p33
        $region26: #{multihead_attention.7} parent=23 // pred_check_branch
          %145 = sbr.rel (%p143) target = $region28
        $region27: #{multihead_attention.7} parent=23 // pred_region
          %p146 = scmp.lt.s32.totalorder %s13, 1
          %s147 = scalar_select %p146, %s13, 1
          %s148 = smul.addr %s147, 8
          %s149 = scalar_lea.vmem %s0, %s148
        $region28: #{multihead_attention.7} parent=23 // pred_fallthru
          _
      $region24: #{multihead_attention.7} parent=5 // pred_fallthru
        _
      %p150 = scmp.le.s32.totalorder 1, %s13
      %p151 = scmp.lt.s32.totalorder %s13, 3
      %p152 = pnand %p150, %p151
      %p153 = pneg %p152
      // Predicated region
      $region29: #{multihead_attention.7} parent=5 // pred_check
        _
      $region30: #{multihead_attention.7} parent=5 // pred_check_branch
        %155 = sbr.rel (%p152) target = $region32
      $region31: #{multihead_attention.7} parent=5 // pred_region
        %s156 = ssub.s32 %s13, 1
        // Predicated region
        $region33: #{multihead_attention.7} parent=31 // pred_check
          %p157 = pneg %p60
        $region34: #{multihead_attention.7} parent=31 // pred_check_branch
          %159 = sbr.rel (%p157) target = $region36
        $region35: #{multihead_attention.7} parent=31 // pred_region
          %161 = dma.done [#allocation3], 512
        $region36: #{multihead_attention.7} parent=31 // pred_fallthru
          _
        %p162 = scmp.lt.s32.totalorder %s18, 1
        %s163 = scalar_select %p162, %s18, 1
        %s164 = smul.addr %s163, 8
        %s165 = scalar_lea.vmem %s0, %s164
        %p166 = pneg %p39
        %p167 = pneg %p36
        %p168 = pneg %p60
        %p169 = pneg %p57
        %p170 = pneg %p81
        %p171 = pneg %p78
        %p172 = pneg %p107
        %p173 = pneg %p104
        %s174 = sand.u32 %s94, 1
        %s175 = scalar_lea.sflag [#allocation4], %s174
        %s176 = sand.u32 %s94, 1
        %s177 = smul.addr %s176, 8
        %s178 = scalar_lea.vmem [#allocation5], %s177
        %p179 = scmp.lt.s32.totalorder %s18, 1
        %s180 = scalar_select %p179, %s18, 1
        %s181 = smul.addr %s180, 8
        %s182 = scalar_lea.vmem %s0, %s181
        %v183 = vld [vmem:[%s182] sm:$0xff]
        %v184 = vld [vmem:[#allocation2] sm:$0xff]
        %v185 = vld [vmem:[#allocation2 + $0x8] sm:$0xff]
        %v186 = vld [vmem:[#allocation2 + $0x10] sm:$0xff]
        %v187 = vld [vmem:[#allocation2 + $0x18] sm:$0xff]
        %v188 = vld [vmem:[%s2] sm:$0x1]
        %v190 = vperm.slane %v188, 0
        %vm192 = vcmask 261120
        %v194 = vsel %vm192, %v183, 0
        %196 = vmatpush.msra.mxu0 0.0
        %197 = vmatpush.msra.mxu0 0.0
        %198 = vmatpush.msra.mxu0 0.0
        %199 = vmatpush.msra.mxu0 0.0
        %200 = vmatpush.msra.mxu0 0.0
        %201 = vmatpush.msra.mxu0 0.0
        %202 = vmatpush.msra.mxu0 0.0
        %203 = vmatpush.msra.mxu0 0.0
        %204 = vmatpush.msra.mxu0 0.0
        %205 = vmatpush.msra.mxu0 0.0
        %206 = vmatpush.msra.mxu0 0.0
        %207 = vmatpush.msra.mxu0 0.0
        %208 = vmatpush.msra.mxu0 %v187
        %209 = vmatpush.msra.mxu0 %v186
        %210 = vmatpush.msra.mxu0 %v185
        %211 = vmatpush.msra.mxu0 %v184
        %212 = vmatmul.f32.gmra.mxu0 %v194
        %v213 = vpop.f32.mrf.mxu0
        %v214 = vadd.f32 %v190, %v213
        %215 = vdwg.mxu0
        %216 = vst.msk [vmem:[%s178] sm:$0xff] %vm192, %v214
        %s217 = sand.u32 %s94, 1
        %s218 = scalar_lea.sflag [#allocation4], %s217
        %s219 = sand.u32 %s94, 1
        %s220 = smul.addr %s219, 8
        %s221 = scalar_lea.vmem [#allocation5], %s220
        // Predicated region
        $region37: #{multihead_attention.7} parent=31 // pred_check
          %p222 = pneg %p104
        $region38: #{multihead_attention.7} parent=31 // pred_check_branch
          %224 = sbr.rel (%p222) target = $region40
        $region39: #{multihead_attention.7} parent=31 // pred_region
          %226 = vsyncadd %s218, 0
          %s227 = smul.addr %s18, 8
          %s228 = scalar_lea.hbm %s3, %s227
          %s230 = sshll.u32 %s221, 4
          %s231 = int_to_ptr.vmem [resolvable:$true] %s230
          %s232 = sshll.u32 %s228, 4
          %s233 = int_to_ptr.hbm [resolvable:$true] %s232
          %235 = dma.vmem_to_hbm [thread:$0]  %s231, 128, %s233, %s218
        $region40: #{multihead_attention.7} parent=31 // pred_fallthru
          _
      $region32: #{multihead_attention.7} parent=5 // pred_fallthru
        _
      %p236 = scmp.le.s32.totalorder 2, %s13
      // Predicated region
      $region41: #{multihead_attention.7} parent=5 // pred_check
        %p237 = pneg %p236
      $region42: #{multihead_attention.7} parent=5 // pred_check_branch
        %239 = sbr.rel (%p237) target = $region44
      $region43: #{multihead_attention.7} parent=5 // pred_region
        %s240 = ssub.s32 %s13, 2
        // Predicated region
        $region45: #{multihead_attention.7} parent=43 // pred_check
          %p241 = pneg %p110
        $region46: #{multihead_attention.7} parent=43 // pred_check_branch
          %243 = sbr.rel (%p241) target = $region48
        $region47: #{multihead_attention.7} parent=43 // pred_region
          %s244 = sand.u32 %s95, 1
          %s245 = scalar_lea.sflag [#allocation4], %s244
          %s246 = sand.u32 %s95, 1
          %s247 = smul.addr %s246, 8
          %s248 = scalar_lea.vmem [#allocation5], %s247
          %250 = dma.done %s245, 128
        $region48: #{multihead_attention.7} parent=43 // pred_fallthru
          _
      $region44: #{multihead_attention.7} parent=5 // pred_fallthru
        _
    $region6: #{multihead_attention.7} parent=1 // loop_footer
      %s17 = sadd.s32 1, %s13
    $region7: #{multihead_attention.7} parent=1 // loop_footer_branch
      %12 = sbr.rel target = $region3
    $region8: #{multihead_attention.7} parent=1 // loop_exit
      _
    %251 = vsyncpa [#allocation3], 1
    %s252 = scalar_lea.sflag [#allocation3], 1
    %253 = vsyncpa %s252, 1
    %254 = vsyncpa [#allocation4], 1
    %s255 = scalar_lea.sflag [#allocation4], 1
    %256 = vsyncpa %s255, 1

// kernel: multihead_attention.6
$region0: #{multihead_attention.6}
  #allocation0 [shape = 'u32[]', space=smem, size = 0x4, offset = 0x4, fixed_abs, tag = 'smem constant byte address 0x4 - core index']
  #allocation1 [shape = 'u32[72,128]{1,0:T(1,128)}', space=vmem, size = 0x9000, scoped, tag = 'internal scratch']
  %s0 = inlined_call_operand.vmem [shape: f32[2,8,32], index: 0, kind: input, shape index: {}]
  %s1 = inlined_call_operand.vmem [shape: f32[2,8,64], index: 1, kind: input, shape index: {}]
  %s2 = inlined_call_operand.hbm [shape: f32[2,4,8,8], index: 2, kind: output, shape index: {0}]
  %s3 = inlined_call_operand.hbm [shape: f32[2,4,8,8], index: 3, kind: output, shape index: {1}]
  %s4 = inlined_call_operand.vmem [shape: f32[2,8,32], index: 4, kind: output, shape index: {2}]
  %5 = xla_tuple %s2, %s3, %s4
  %s6 = sld [smem:[#allocation0]]
  $region57: #{multihead_attention.6} parent=0
    _
  %s8 = ssub.s32 1, %s6
  %s9 = scalar_select 0, %s8, %s6
  $region1: #{multihead_attention.6} parent=0
    #allocation2 [shape = 'u8[32768]{0}', space=vmem, size = 0x8000, scoped, tag = 'output window, operand 0']
    #allocation3 [shape = 's32[2]{0}', space=sflag, size = 0x8, scoped, tag = 'scoped memory for multihead_attention.6']
    #allocation4 [shape = 'u8[32768]{0}', space=vmem, size = 0x8000, scoped, tag = 'output window, operand 1']
    #allocation5 [shape = 's32[2]{0}', space=sflag, size = 0x8, scoped, tag = 'scoped memory for multihead_attention.6']
    %10 = vsyncpa [#allocation3], 0
    %s11 = scalar_lea.sflag [#allocation3], 1
    %12 = vsyncpa %s11, 0
    %13 = vsyncpa [#allocation5], 0
    %s14 = scalar_lea.sflag [#allocation5], 1
    %15 = vsyncpa %s14, 0
    loop: start=0, step=1, limit=4
    $region2: #{multihead_attention.6} parent=1 // loop_pre_header
      _
    $region3: #{multihead_attention.6} parent=1 // loop_header
      %s17 = sphi 0, %s21
      %p18 = scmp.ge.s32.totalorder %s17, 4
      %s27 = sphi 0, %s29
      %s30 = sphi 0, %s27
      %s31 = sphi 0, %s30
      %s47 = sphi 0, %s31
      %s53 = sphi 0, %s55
      %s56 = sphi 0, %s53
      %s57 = sphi 0, %s56
      %s73 = sphi 0, %s57
      %s79 = sphi 0, %s81
      %s82 = sphi 0, %s79
      %s83 = sphi 0, %s82
      %s99 = sphi 0, %s83
      %s105 = sphi 0, %s107
      %s108 = sphi 0, %s105
      %s109 = sphi 0, %s108
      %s125 = sphi 0, %s109
      %s131 = sphi 0, %s133
      %s134 = sphi 0, %s131
      %s135 = sphi 0, %s134
      %s151 = sphi 0, %s135
    $region4: #{multihead_attention.6} parent=1 // loop_header_branch
      %20 = sbr.rel (%p18) target = $region8
    $region5: #{multihead_attention.6} parent=1 // loop_body
      %s22 = ssub.s32 %s17, 1
      %s23 = ssub.s32 %s17, 2
      %s24 = sadd.s32 %s17, 1
      %s25 = ssub.s32 %s17, %s24
      %p26 = scmp.eq.s32.totalorder %s25, 0
      %s28 = sadd.s32 %s27, 1
      %s29 = scalar_select %p26, %s27, %s28
      %p32 = pneg %p26
      %p33 = scmp.eq.s32.totalorder %s17, 1
      %p34 = por %p32, %p33
      %p35 = scmp.ne.s32.totalorder %s27, %s30
      %p36 = scmp.eq.s32.totalorder %s17, 0
      %p37 = por %p35, %p36
      %p38 = scmp.ne.s32.totalorder %s27, %s30
      %p39 = scmp.eq.s32.totalorder %s22, 1
      %p40 = por %p38, %p39
      %p41 = scmp.ne.s32.totalorder %s30, %s31
      %p42 = scmp.eq.s32.totalorder %s22, 0
      %p43 = por %p41, %p42
      %p44 = scmp.ne.s32.totalorder %s30, %s31
      %p45 = scmp.eq.s32.totalorder %s23, 1
      %p46 = por %p44, %p45
      %p48 = scmp.ne.s32.totalorder %s31, %s47
      %p49 = scmp.eq.s32.totalorder %s23, 0
      %p50 = por %p48, %p49
      %s51 = ssub.s32 %s17, %s24
      %p52 = scmp.eq.s32.totalorder %s51, 0
      %s54 = sadd.s32 %s53, 1
      %s55 = scalar_select %p52, %s53, %s54
      %p58 = pneg %p52
      %p59 = scmp.eq.s32.totalorder %s17, 1
      %p60 = por %p58, %p59
      %p61 = scmp.ne.s32.totalorder %s53, %s56
      %p62 = scmp.eq.s32.totalorder %s17, 0
      %p63 = por %p61, %p62
      %p64 = scmp.ne.s32.totalorder %s53, %s56
      %p65 = scmp.eq.s32.totalorder %s22, 1
      %p66 = por %p64, %p65
      %p67 = scmp.ne.s32.totalorder %s56, %s57
      %p68 = scmp.eq.s32.totalorder %s22, 0
      %p69 = por %p67, %p68
      %p70 = scmp.ne.s32.totalorder %s56, %s57
      %p71 = scmp.eq.s32.totalorder %s23, 1
      %p72 = por %p70, %p71
      %p74 = scmp.ne.s32.totalorder %s57, %s73
      %p75 = scmp.eq.s32.totalorder %s23, 0
      %p76 = por %p74, %p75
      %s77 = ssub.s32 %s17, %s24
      %p78 = scmp.eq.s32.totalorder %s77, 0
      %s80 = sadd.s32 %s79, 1
      %s81 = scalar_select %p78, %s79, %s80
      %p84 = pneg %p78
      %p85 = scmp.eq.s32.totalorder %s17, 1
      %p86 = por %p84, %p85
      %p87 = scmp.ne.s32.totalorder %s79, %s82
      %p88 = scmp.eq.s32.totalorder %s17, 0
      %p89 = por %p87, %p88
      %p90 = scmp.ne.s32.totalorder %s79, %s82
      %p91 = scmp.eq.s32.totalorder %s22, 1
      %p92 = por %p90, %p91
      %p93 = scmp.ne.s32.totalorder %s82, %s83
      %p94 = scmp.eq.s32.totalorder %s22, 0
      %p95 = por %p93, %p94
      %p96 = scmp.ne.s32.totalorder %s82, %s83
      %p97 = scmp.eq.s32.totalorder %s23, 1
      %p98 = por %p96, %p97
      %p100 = scmp.ne.s32.totalorder %s83, %s99
      %p101 = scmp.eq.s32.totalorder %s23, 0
      %p102 = por %p100, %p101
      %s103 = ssub.s32 %s17, %s24
      %p104 = scmp.eq.s32.totalorder %s103, 0
      %s106 = sadd.s32 %s105, 1
      %s107 = scalar_select %p104, %s105, %s106
      %p110 = pneg %p104
      %p111 = scmp.eq.s32.totalorder %s17, 1
      %p112 = por %p110, %p111
      %p113 = scmp.ne.s32.totalorder %s105, %s108
      %p114 = scmp.eq.s32.totalorder %s17, 0
      %p115 = por %p113, %p114
      %p116 = scmp.ne.s32.totalorder %s105, %s108
      %p117 = scmp.eq.s32.totalorder %s22, 1
      %p118 = por %p116, %p117
      %p119 = scmp.ne.s32.totalorder %s108, %s109
      %p120 = scmp.eq.s32.totalorder %s22, 0
      %p121 = por %p119, %p120
      %p122 = scmp.ne.s32.totalorder %s108, %s109
      %p123 = scmp.eq.s32.totalorder %s23, 1
      %p124 = por %p122, %p123
      %p126 = scmp.ne.s32.totalorder %s109, %s125
      %p127 = scmp.eq.s32.totalorder %s23, 0
      %p128 = por %p126, %p127
      %s129 = ssub.s32 %s17, %s24
      %p130 = scmp.eq.s32.totalorder %s129, 0
      %s132 = sadd.s32 %s131, 1
      %s133 = scalar_select %p130, %s131, %s132
      %p136 = pneg %p130
      %p137 = scmp.eq.s32.totalorder %s17, 1
      %p138 = por %p136, %p137
      %p139 = scmp.ne.s32.totalorder %s131, %s134
      %p140 = scmp.eq.s32.totalorder %s17, 0
      %p141 = por %p139, %p140
      %p142 = scmp.ne.s32.totalorder %s131, %s134
      %p143 = scmp.eq.s32.totalorder %s22, 1
      %p144 = por %p142, %p143
      %p145 = scmp.ne.s32.totalorder %s134, %s135
      %p146 = scmp.eq.s32.totalorder %s22, 0
      %p147 = por %p145, %p146
      %p148 = scmp.ne.s32.totalorder %s134, %s135
      %p149 = scmp.eq.s32.totalorder %s23, 1
      %p150 = por %p148, %p149
      %p152 = scmp.ne.s32.totalorder %s135, %s151
      %p153 = scmp.eq.s32.totalorder %s23, 0
      %p154 = por %p152, %p153
      %p155 = scmp.le.s32.totalorder 1, %s17
      %p156 = scmp.lt.s32.totalorder %s17, 3
      %p157 = pnand %p155, %p156
      %p158 = pneg %p157
      // Predicated region
      $region9: #{multihead_attention.6} parent=5 // pred_check
        _
      $region10: #{multihead_attention.6} parent=5 // pred_check_branch
        %160 = sbr.rel (%p157) target = $region12
      $region11: #{multihead_attention.6} parent=5 // pred_region
        %s161 = ssub.s32 %s17, 1
      $region12: #{multihead_attention.6} parent=5 // pred_fallthru
        _
      %p162 = scmp.lt.s32.totalorder %s17, 2
      // Predicated region
      $region13: #{multihead_attention.6} parent=5 // pred_check
        %p163 = pneg %p162
      $region14: #{multihead_attention.6} parent=5 // pred_check_branch
        %165 = sbr.rel (%p163) target = $region16
      $region15: #{multihead_attention.6} parent=5 // pred_region
        // Predicated region
        $region17: #{multihead_attention.6} parent=15 // pred_check
          %p166 = pneg %p37
        $region18: #{multihead_attention.6} parent=15 // pred_check_branch
          %168 = sbr.rel (%p166) target = $region20
        $region19: #{multihead_attention.6} parent=15 // pred_region
          %p169 = scmp.lt.s32.totalorder %s17, 1
          %s170 = scalar_select %p169, %s17, 1
          %s171 = smul.addr %s170, 8
          %s172 = scalar_lea.vmem %s0, %s171
        $region20: #{multihead_attention.6} parent=15 // pred_fallthru
          _
        // Predicated region
        $region21: #{multihead_attention.6} parent=15 // pred_check
          %p173 = pneg %p63
        $region22: #{multihead_attention.6} parent=15 // pred_check_branch
          %175 = sbr.rel (%p173) target = $region24
        $region23: #{multihead_attention.6} parent=15 // pred_region
          %p176 = scmp.lt.s32.totalorder %s17, 1
          %s177 = scalar_select %p176, %s17, 1
          %s178 = smul.addr %s177, 8
          %s179 = scalar_lea.vmem %s1, %s178
        $region24: #{multihead_attention.6} parent=15 // pred_fallthru
          _
      $region16: #{multihead_attention.6} parent=5 // pred_fallthru
        _
      %p180 = scmp.le.s32.totalorder 1, %s17
      %p181 = scmp.lt.s32.totalorder %s17, 3
      %p182 = pnand %p180, %p181
      %p183 = pneg %p182
      // Predicated region
      $region25: #{multihead_attention.6} parent=5 // pred_check
        _
      $region26: #{multihead_attention.6} parent=5 // pred_check_branch
        %185 = sbr.rel (%p182) target = $region28
      $region27: #{multihead_attention.6} parent=5 // pred_region
        %s186 = ssub.s32 %s17, 1
        %p187 = scmp.lt.s32.totalorder %s22, 1
        %s188 = scalar_select %p187, %s22, 1
        %s189 = smul.addr %s188, 8
        %s190 = scalar_lea.vmem %s0, %s189
        %p191 = pneg %p43
        %p192 = pneg %p40
        %p193 = scmp.lt.s32.totalorder %s22, 1
        %s194 = scalar_select %p193, %s22, 1
        %s195 = smul.addr %s194, 8
        %s196 = scalar_lea.vmem %s1, %s195
        %p197 = pneg %p69
        %p198 = pneg %p66
        %p199 = pneg %p95
        %p200 = pneg %p92
        %s201 = sand.u32 %s82, 1
        %s202 = scalar_lea.sflag [#allocation3], %s201
        %s203 = sand.u32 %s82, 1
        %s204 = smul.addr %s203, 32
        %s205 = scalar_lea.vmem [#allocation2], %s204
        %p206 = pneg %p121
        %p207 = pneg %p118
        %s208 = sand.u32 %s108, 1
        %s209 = scalar_lea.sflag [#allocation5], %s208
        %s210 = sand.u32 %s108, 1
        %s211 = smul.addr %s210, 32
        %s212 = scalar_lea.vmem [#allocation4], %s211
        %p213 = pneg %p147
        %p214 = pneg %p144
        %p215 = scmp.lt.s32.totalorder %s22, 1
        %s216 = scalar_select %p215, %s22, 1
        %s217 = smul.addr %s216, 8
        %s218 = scalar_lea.vmem %s4, %s217
        %p219 = scmp.lt.s32.totalorder %s22, 1
        %s220 = scalar_select %p219, %s22, 1
        %s221 = smul.addr %s220, 8
        %s222 = scalar_lea.vmem %s0, %s221
        %p223 = scmp.lt.s32.totalorder %s22, 1
        %s224 = scalar_select %p223, %s22, 1
        %s225 = smul.addr %s224, 8
        %s226 = scalar_lea.vmem %s1, %s225
        %p227 = scmp.lt.s32.totalorder %s22, 1
        %s228 = scalar_select %p227, %s22, 1
        %s229 = smul.addr %s228, 8
        %s230 = scalar_lea.vmem %s4, %s229
        %v231 = vld [vmem:[%s222] sm:$0xff]
        %v232 = vld [vmem:[%s226] sm:$0xff]
        %vm233 = vcmask 64512
        %v235 = vsel %vm233, %v231, 0
        %v238 = vsel %vm233, %v232, 0
        %240 = vmatpush.xpose.msra.mxu0 0.0
        %241 = vmatpush.xpose.msra.mxu0 0.0
        %242 = vmatpush.xpose.msra.mxu0 0.0
        %243 = vmatpush.xpose.msra.mxu0 0.0
        %244 = vmatpush.xpose.msra.mxu0 0.0
        %245 = vmatpush.xpose.msra.mxu0 0.0
        %246 = vmatpush.xpose.msra.mxu0 0.0
        %247 = vmatpush.xpose.msra.mxu0 0.0
        %248 = vmatpush.xpose.msra.mxu0 0.0
        %249 = vmatpush.xpose.msra.mxu0 0.0
        %250 = vmatpush.xpose.msra.mxu0 0.0
        %251 = vmatpush.xpose.msra.mxu0 0.0
        %252 = vmatpush.xpose.msra.mxu0 0.0
        %253 = vmatpush.xpose.msra.mxu0 0.0
        %254 = vmatpush.xpose.msra.mxu0 0.0
        %255 = vmatpush.xpose.msra.mxu0 %v238
        %256 = vmatmul.f32.gmra.mxu0 %v235
        %v257 = vpop.f32.mrf.mxu0
        %v258 = vadd.f32 0.0, %v257
        %259 = vdwg.mxu0
        %260 = vst.msk [vmem:[%s205] sm:$0xff] %vm233, %v258
        %v261 = vsel %vm233, %v258, -inf
        %262 = vmax.xlane.f32.xlu0 %v261
        %v263 = vpop.xlane.xlu0 %262
        %v264 = vsub.f32 %v258, %v263
        %v265 = vmul.f32 %v264, 1.442695
        %v266 = vpow.pop %v265
        %v267 = vsel %vm233, %v266, 0.0
        %268 = vadd.xlane.f32.xlu0 %v267
        %v269 = vpop.xlane.xlu0 %268
        %v270 = vrcp.pop %v269
        %v271 = vmul.f32 %v269, %v270
        %v272 = vsub.f32 1.0, %v271
        %v273 = vmul.f32 %v270, %v272
        %v274 = vadd.f32 %v270, %v273
        %vm275 = vweird.f32 %v269
        %vm276 = vweird.f32 %v270
        %vm277 = vmor %vm275, %vm276
        %v278 = vsel %vm277, %v270, %v274
        %v279 = vand.u32 2147483647, %v269
        %vm280 = vcmp.eq.f32.partialorder %v279, 8.507059e+37
        %v281 = vand.u32 %v269, 2147483648
        %v282 = vor.u32 1.1754944e-38, %v281
        %v283 = vsel %vm280, %v282, %v278
        %v284 = vmul.f32 %v266, %v283
        %285 = vst.msk [vmem:[%s212] sm:$0xff] %vm233, %v284
        %286 = vrot.lane.b32.xlu0 %v232, 96
        %v287 = vpop.permute.xlu0 %286
        %v290 = vsel %vm233, %v284, 0
        %292 = vmatpush.msra.mxu0 0.0
        %293 = vmatpush.msra.mxu0 0.0
        %294 = vmatpush.msra.mxu0 0.0
        %295 = vmatpush.msra.mxu0 0.0
        %296 = vmatpush.msra.mxu0 0.0
        %297 = vmatpush.msra.mxu0 0.0
        %298 = vmatpush.msra.mxu0 0.0
        %299 = vmatpush.msra.mxu0 0.0
        %300 = vmatpush.msra.mxu0 0.0
        %301 = vmatpush.msra.mxu0 0.0
        %302 = vmatpush.msra.mxu0 0.0
        %303 = vmatpush.msra.mxu0 0.0
        %304 = vmatpush.msra.mxu0 0.0
        %305 = vmatpush.msra.mxu0 0.0
        %306 = vmatpush.msra.mxu0 0.0
        %307 = vmatpush.msra.mxu0 %v287
        %308 = vmatmul.f32.gmra.mxu0 %v290
        %v309 = vpop.f32.mrf.mxu0
        %v310 = vadd.f32 0.0, %v309
        %311 = vdwg.mxu0
        %312 = vrot.lane.b32.xlu0 %v231, 120
        %v313 = vpop.permute.xlu0 %312
        %314 = vrot.lane.b32.xlu0 %v232, 120
        %v315 = vpop.permute.xlu0 %314
        %v316 = vsel %vm233, %v313, 0
        %v318 = vsel %vm233, %v315, 0
        %320 = vmatpush.xpose.msra.mxu0 0.0
        %321 = vmatpush.xpose.msra.mxu0 0.0
        %322 = vmatpush.xpose.msra.mxu0 0.0
        %323 = vmatpush.xpose.msra.mxu0 0.0
        %324 = vmatpush.xpose.msra.mxu0 0.0
        %325 = vmatpush.xpose.msra.mxu0 0.0
        %326 = vmatpush.xpose.msra.mxu0 0.0
        %327 = vmatpush.xpose.msra.mxu0 0.0
        %328 = vmatpush.xpose.msra.mxu0 0.0
        %329 = vmatpush.xpose.msra.mxu0 0.0
        %330 = vmatpush.xpose.msra.mxu0 0.0
        %331 = vmatpush.xpose.msra.mxu0 0.0
        %332 = vmatpush.xpose.msra.mxu0 0.0
        %333 = vmatpush.xpose.msra.mxu0 0.0
        %334 = vmatpush.xpose.msra.mxu0 0.0
        %335 = vmatpush.xpose.msra.mxu0 %v318
        %336 = vmatmul.f32.gmra.mxu0 %v316
        %v337 = vpop.f32.mrf.mxu0
        %v338 = vadd.f32 0.0, %v337
        %339 = vdwg.mxu0
        %s340 = scalar_lea.vmem %s205, 8 [#allocation2]
        %341 = vst.msk [vmem:[%s340] sm:$0xff] %vm233, %v338
        %v342 = vsel %vm233, %v338, -inf
        %343 = vmax.xlane.f32.xlu0 %v342
        %v344 = vpop.xlane.xlu0 %343
        %v345 = vsub.f32 %v338, %v344
        %v346 = vmul.f32 %v345, 1.442695
        %v347 = vpow.pop %v346
        %v348 = vsel %vm233, %v347, 0.0
        %349 = vadd.xlane.f32.xlu0 %v348
        %v350 = vpop.xlane.xlu0 %349
        %v351 = vrcp.pop %v350
        %v352 = vmul.f32 %v350, %v351
        %v353 = vsub.f32 1.0, %v352
        %v354 = vmul.f32 %v351, %v353
        %v355 = vadd.f32 %v351, %v354
        %vm356 = vweird.f32 %v350
        %vm357 = vweird.f32 %v351
        %vm358 = vmor %vm356, %vm357
        %v359 = vsel %vm358, %v351, %v355
        %v360 = vand.u32 2147483647, %v350
        %vm361 = vcmp.eq.f32.partialorder %v360, 8.507059e+37
        %v362 = vand.u32 %v350, 2147483648
        %v363 = vor.u32 1.1754944e-38, %v362
        %v364 = vsel %vm361, %v363, %v359
        %v365 = vmul.f32 %v347, %v364
        %s366 = scalar_lea.vmem %s212, 8 [#allocation4]
        %367 = vst.msk [vmem:[%s366] sm:$0xff] %vm233, %v365
        %368 = vrot.lane.b32.xlu0 %v232, 88
        %v369 = vpop.permute.xlu0 %368
        %v372 = vsel %vm233, %v365, 0
        %374 = vmatpush.msra.mxu0 0.0
        %375 = vmatpush.msra.mxu0 0.0
        %376 = vmatpush.msra.mxu0 0.0
        %377 = vmatpush.msra.mxu0 0.0
        %378 = vmatpush.msra.mxu0 0.0
        %379 = vmatpush.msra.mxu0 0.0
        %380 = vmatpush.msra.mxu0 0.0
        %381 = vmatpush.msra.mxu0 0.0
        %382 = vmatpush.msra.mxu0 0.0
        %383 = vmatpush.msra.mxu0 0.0
        %384 = vmatpush.msra.mxu0 0.0
        %385 = vmatpush.msra.mxu0 0.0
        %386 = vmatpush.msra.mxu0 0.0
        %387 = vmatpush.msra.mxu0 0.0
        %388 = vmatpush.msra.mxu0 0.0
        %389 = vmatpush.msra.mxu0 %v369
        %390 = vmatmul.f32.gmra.mxu0 %v372
        %v391 = vpop.f32.mrf.mxu0
        %v392 = vadd.f32 0.0, %v391
        %393 = vdwg.mxu0
        %394 = vrot.lane.b32.xlu0 %v231, 112
        %v395 = vpop.permute.xlu0 %394
        %396 = vrot.lane.b32.xlu0 %v232, 112
        %v397 = vpop.permute.xlu0 %396
        %v398 = vsel %vm233, %v395, 0
        %v400 = vsel %vm233, %v397, 0
        %402 = vmatpush.xpose.msra.mxu0 0.0
        %403 = vmatpush.xpose.msra.mxu0 0.0
        %404 = vmatpush.xpose.msra.mxu0 0.0
        %405 = vmatpush.xpose.msra.mxu0 0.0
        %406 = vmatpush.xpose.msra.mxu0 0.0
        %407 = vmatpush.xpose.msra.mxu0 0.0
        %408 = vmatpush.xpose.msra.mxu0 0.0
        %409 = vmatpush.xpose.msra.mxu0 0.0
        %410 = vmatpush.xpose.msra.mxu0 0.0
        %411 = vmatpush.xpose.msra.mxu0 0.0
        %412 = vmatpush.xpose.msra.mxu0 0.0
        %413 = vmatpush.xpose.msra.mxu0 0.0
        %414 = vmatpush.xpose.msra.mxu0 0.0
        %415 = vmatpush.xpose.msra.mxu0 0.0
        %416 = vmatpush.xpose.msra.mxu0 0.0
        %417 = vmatpush.xpose.msra.mxu0 %v400
        %418 = vmatmul.f32.gmra.mxu0 %v398
        %v419 = vpop.f32.mrf.mxu0
        %v420 = vadd.f32 0.0, %v419
        %421 = vdwg.mxu0
        %s422 = scalar_lea.vmem %s205, 16 [#allocation2]
        %423 = vst.msk [vmem:[%s422] sm:$0xff] %vm233, %v420
        %v424 = vsel %vm233, %v420, -inf
        %425 = vmax.xlane.f32.xlu0 %v424
        %v426 = vpop.xlane.xlu0 %425
        %v427 = vsub.f32 %v420, %v426
        %v428 = vmul.f32 %v427, 1.442695
        %v429 = vpow.pop %v428
        %v430 = vsel %vm233, %v429, 0.0
        %431 = vadd.xlane.f32.xlu0 %v430
        %v432 = vpop.xlane.xlu0 %431
        %v433 = vrcp.pop %v432
        %v434 = vmul.f32 %v432, %v433
        %v435 = vsub.f32 1.0, %v434
        %v436 = vmul.f32 %v433, %v435
        %v437 = vadd.f32 %v433, %v436
        %vm438 = vweird.f32 %v432
        %vm439 = vweird.f32 %v433
        %vm440 = vmor %vm438, %vm439
        %v441 = vsel %vm440, %v433, %v437
        %v442 = vand.u32 2147483647, %v432
        %vm443 = vcmp.eq.f32.partialorder %v442, 8.507059e+37
        %v444 = vand.u32 %v432, 2147483648
        %v445 = vor.u32 1.1754944e-38, %v444
        %v446 = vsel %vm443, %v445, %v441
        %v447 = vmul.f32 %v429, %v446
        %s448 = scalar_lea.vmem %s212, 16 [#allocation4]
        %449 = vst.msk [vmem:[%s448] sm:$0xff] %vm233, %v447
        %450 = vrot.lane.b32.xlu0 %v232, 80
        %v451 = vpop.permute.xlu0 %450
        %v454 = vsel %vm233, %v447, 0
        %456 = vmatpush.msra.mxu0 0.0
        %457 = vmatpush.msra.mxu0 0.0
        %458 = vmatpush.msra.mxu0 0.0
        %459 = vmatpush.msra.mxu0 0.0
        %460 = vmatpush.msra.mxu0 0.0
        %461 = vmatpush.msra.mxu0 0.0
        %462 = vmatpush.msra.mxu0 0.0
        %463 = vmatpush.msra.mxu0 0.0
        %464 = vmatpush.msra.mxu0 0.0
        %465 = vmatpush.msra.mxu0 0.0
        %466 = vmatpush.msra.mxu0 0.0
        %467 = vmatpush.msra.mxu0 0.0
        %468 = vmatpush.msra.mxu0 0.0
        %469 = vmatpush.msra.mxu0 0.0
        %470 = vmatpush.msra.mxu0 0.0
        %471 = vmatpush.msra.mxu0 %v451
        %472 = vmatmul.f32.gmra.mxu0 %v454
        %v473 = vpop.f32.mrf.mxu0
        %v474 = vadd.f32 0.0, %v473
        %475 = vdwg.mxu0
        %476 = vrot.lane.b32.xlu0 %v231, 104
        %v477 = vpop.permute.xlu0 %476
        %478 = vrot.lane.b32.xlu0 %v232, 104
        %v479 = vpop.permute.xlu0 %478
        %v480 = vsel %vm233, %v477, 0
        %v482 = vsel %vm233, %v479, 0
        %484 = vmatpush.xpose.msra.mxu0 0.0
        %485 = vmatpush.xpose.msra.mxu0 0.0
        %486 = vmatpush.xpose.msra.mxu0 0.0
        %487 = vmatpush.xpose.msra.mxu0 0.0
        %488 = vmatpush.xpose.msra.mxu0 0.0
        %489 = vmatpush.xpose.msra.mxu0 0.0
        %490 = vmatpush.xpose.msra.mxu0 0.0
        %491 = vmatpush.xpose.msra.mxu0 0.0
        %492 = vmatpush.xpose.msra.mxu0 0.0
        %493 = vmatpush.xpose.msra.mxu0 0.0
        %494 = vmatpush.xpose.msra.mxu0 0.0
        %495 = vmatpush.xpose.msra.mxu0 0.0
        %496 = vmatpush.xpose.msra.mxu0 0.0
        %497 = vmatpush.xpose.msra.mxu0 0.0
        %498 = vmatpush.xpose.msra.mxu0 0.0
        %499 = vmatpush.xpose.msra.mxu0 %v482
        %500 = vmatmul.f32.gmra.mxu0 %v480
        %v501 = vpop.f32.mrf.mxu0
        %v502 = vadd.f32 0.0, %v501
        %503 = vdwg.mxu0
        %s504 = scalar_lea.vmem %s205, 24 [#allocation2]
        %505 = vst.msk [vmem:[%s504] sm:$0xff] %vm233, %v502
        %v506 = vsel %vm233, %v502, -inf
        %507 = vmax.xlane.f32.xlu0 %v506
        %v508 = vpop.xlane.xlu0 %507
        %v509 = vsub.f32 %v502, %v508
        %v510 = vmul.f32 %v509, 1.442695
        %v511 = vpow.pop %v510
        %v512 = vsel %vm233, %v511, 0.0
        %513 = vadd.xlane.f32.xlu0 %v512
        %v514 = vpop.xlane.xlu0 %513
        %v515 = vrcp.pop %v514
        %v516 = vmul.f32 %v514, %v515
        %v517 = vsub.f32 1.0, %v516
        %v518 = vmul.f32 %v515, %v517
        %v519 = vadd.f32 %v515, %v518
        %vm520 = vweird.f32 %v514
        %vm521 = vweird.f32 %v515
        %vm522 = vmor %vm520, %vm521
        %v523 = vsel %vm522, %v515, %v519
        %v524 = vand.u32 2147483647, %v514
        %vm525 = vcmp.eq.f32.partialorder %v524, 8.507059e+37
        %v526 = vand.u32 %v514, 2147483648
        %v527 = vor.u32 1.1754944e-38, %v526
        %v528 = vsel %vm525, %v527, %v523
        %v529 = vmul.f32 %v511, %v528
        %s530 = scalar_lea.vmem %s212, 24 [#allocation4]
        %531 = vst.msk [vmem:[%s530] sm:$0xff] %vm233, %v529
        %532 = vrot.lane.b32.xlu0 %v232, 72
        %v533 = vpop.permute.xlu0 %532
        %v536 = vsel %vm233, %v529, 0
        %538 = vmatpush.msra.mxu0 0.0
        %539 = vmatpush.msra.mxu0 0.0
        %540 = vmatpush.msra.mxu0 0.0
        %541 = vmatpush.msra.mxu0 0.0
        %542 = vmatpush.msra.mxu0 0.0
        %543 = vmatpush.msra.mxu0 0.0
        %544 = vmatpush.msra.mxu0 0.0
        %545 = vmatpush.msra.mxu0 0.0
        %546 = vmatpush.msra.mxu0 0.0
        %547 = vmatpush.msra.mxu0 0.0
        %548 = vmatpush.msra.mxu0 0.0
        %549 = vmatpush.msra.mxu0 0.0
        %550 = vmatpush.msra.mxu0 0.0
        %551 = vmatpush.msra.mxu0 0.0
        %552 = vmatpush.msra.mxu0 0.0
        %553 = vmatpush.msra.mxu0 %v533
        %554 = vmatmul.f32.gmra.mxu0 %v536
        %v555 = vpop.f32.mrf.mxu0
        %v556 = vadd.f32 0.0, %v555
        %557 = vdwg.mxu0
        %559 = vrot.lane.b32.xlu0 %v392, 8
        %v560 = vpop.permute.xlu0 %559
        %563 = vrot.lane.b32.xlu0 %v474, 16
        %v564 = vpop.permute.xlu0 %563
        %567 = vrot.lane.b32.xlu0 %v556, 24
        %v568 = vpop.permute.xlu0 %567
        %v570 = vsel %vm233, %v310, %v560
        %vm571 = vcmask 130048
        %v572 = vsel %vm571, %v570, %v564
        %vm573 = vcmask 195584
        %v574 = vsel %vm573, %v572, %v568
        %vm575 = vcmask 261120
        %576 = vst.msk [vmem:[%s230] sm:$0xff] %vm575, %v574
        %s577 = sand.u32 %s82, 1
        %s578 = scalar_lea.sflag [#allocation3], %s577
        %s579 = sand.u32 %s82, 1
        %s580 = smul.addr %s579, 32
        %s581 = scalar_lea.vmem [#allocation2], %s580
        %s582 = sand.u32 %s108, 1
        %s583 = scalar_lea.sflag [#allocation5], %s582
        %s584 = sand.u32 %s108, 1
        %s585 = smul.addr %s584, 32
        %s586 = scalar_lea.vmem [#allocation4], %s585
        %p587 = scmp.lt.s32.totalorder %s22, 1
        %s588 = scalar_select %p587, %s22, 1
        %s589 = smul.addr %s588, 8
        %s590 = scalar_lea.vmem %s4, %s589
        // Predicated region
        $region29: #{multihead_attention.6} parent=27 // pred_check
          %p591 = pneg %p92
        $region30: #{multihead_attention.6} parent=27 // pred_check_branch
          %593 = sbr.rel (%p591) target = $region32
        $region31: #{multihead_attention.6} parent=27 // pred_region
          %595 = vsyncadd %s578, 0
          %s596 = smul.addr %s22, 4
          %s597 = smul.addr %s596, 8
          %s598 = scalar_lea.hbm %s2, %s597
          %s599 = sshll.u32 %s581, 4
          %s600 = int_to_ptr.vmem [resolvable:$true] %s599
          %s601 = sshll.u32 %s598, 4
          %s602 = int_to_ptr.hbm [resolvable:$true] %s601
          %607 = dma.vmem_to_hbm [thread:$0]  %s600, 512, %s602, %s578, 128, 128, 8
        $region32: #{multihead_attention.6} parent=27 // pred_fallthru
          _
        // Predicated region
        $region33: #{multihead_attention.6} parent=27 // pred_check
          %p608 = pneg %p118
        $region34: #{multihead_attention.6} parent=27 // pred_check_branch
          %610 = sbr.rel (%p608) target = $region36
        $region35: #{multihead_attention.6} parent=27 // pred_region
          %612 = vsyncadd %s583, 0
          %s613 = smul.addr %s22, 4
          %s614 = smul.addr %s613, 8
          %s615 = scalar_lea.hbm %s3, %s614
          %s616 = sshll.u32 %s586, 4
          %s617 = int_to_ptr.vmem [resolvable:$true] %s616
          %s618 = sshll.u32 %s615, 4
          %s619 = int_to_ptr.hbm [resolvable:$true] %s618
          %624 = dma.vmem_to_hbm [thread:$0]  %s617, 512, %s619, %s583, 128, 128, 8
        $region36: #{multihead_attention.6} parent=27 // pred_fallthru
          _
        // Predicated region
        $region37: #{multihead_attention.6} parent=27 // pred_check
          %p625 = pneg %p144
        $region38: #{multihead_attention.6} parent=27 // pred_check_branch
          %627 = sbr.rel (%p625) target = $region40
        $region39: #{multihead_attention.6} parent=27 // pred_region
          _
        $region40: #{multihead_attention.6} parent=27 // pred_fallthru
          _
      $region28: #{multihead_attention.6} parent=5 // pred_fallthru
        _
      %p628 = scmp.le.s32.totalorder 2, %s17
      // Predicated region
      $region41: #{multihead_attention.6} parent=5 // pred_check
        %p629 = pneg %p628
      $region42: #{multihead_attention.6} parent=5 // pred_check_branch
        %631 = sbr.rel (%p629) target = $region44
      $region43: #{multihead_attention.6} parent=5 // pred_region
        %s632 = ssub.s32 %s17, 2
        // Predicated region
        $region45: #{multihead_attention.6} parent=43 // pred_check
          %p633 = pneg %p98
        $region46: #{multihead_attention.6} parent=43 // pred_check_branch
          %635 = sbr.rel (%p633) target = $region48
        $region47: #{multihead_attention.6} parent=43 // pred_region
          %s636 = sand.u32 %s83, 1
          %s637 = scalar_lea.sflag [#allocation3], %s636
          %s638 = sand.u32 %s83, 1
          %s639 = smul.addr %s638, 32
          %s640 = scalar_lea.vmem [#allocation2], %s639
          %642 = dma.done %s637, 512
        $region48: #{multihead_attention.6} parent=43 // pred_fallthru
          _
        // Predicated region
        $region49: #{multihead_attention.6} parent=43 // pred_check
          %p643 = pneg %p124
        $region50: #{multihead_attention.6} parent=43 // pred_check_branch
          %645 = sbr.rel (%p643) target = $region52
        $region51: #{multihead_attention.6} parent=43 // pred_region
          %s646 = sand.u32 %s109, 1
          %s647 = scalar_lea.sflag [#allocation5], %s646
          %s648 = sand.u32 %s109, 1
          %s649 = smul.addr %s648, 32
          %s650 = scalar_lea.vmem [#allocation4], %s649
          %652 = dma.done %s647, 512
        $region52: #{multihead_attention.6} parent=43 // pred_fallthru
          _
        // Predicated region
        $region53: #{multihead_attention.6} parent=43 // pred_check
          %p653 = pneg %p150
        $region54: #{multihead_attention.6} parent=43 // pred_check_branch
          %655 = sbr.rel (%p653) target = $region56
        $region55: #{multihead_attention.6} parent=43 // pred_region
          %p656 = scmp.lt.s32.totalorder %s23, 1
          %s657 = scalar_select %p656, %s23, 1
          %s658 = smul.addr %s657, 8
          %s659 = scalar_lea.vmem %s4, %s658
        $region56: #{multihead_attention.6} parent=43 // pred_fallthru
          _
      $region44: #{multihead_attention.6} parent=5 // pred_fallthru
        _
    $region6: #{multihead_attention.6} parent=1 // loop_footer
      %s21 = sadd.s32 1, %s17
    $region7: #{multihead_attention.6} parent=1 // loop_footer_branch
      %16 = sbr.rel target = $region3
    $region8: #{multihead_attention.6} parent=1 // loop_exit
      _
    %660 = vsyncpa [#allocation3], 1
    %s661 = scalar_lea.sflag [#allocation3], 1
    %662 = vsyncpa %s661, 1
    %663 = vsyncpa [#allocation5], 1
    %s664 = scalar_lea.sflag [#allocation5], 1
    %665 = vsyncpa %s664, 1

</llo_original>
